<compile_context>
chip_gen: v7x
topology: tpu7x:2x2x1
jax: 0.10.0
libtpu: 0.0.40
codegen_flags: <defaults>
</compile_context>

<pallas_src>
import jax
import jax.numpy as jnp
from jax.experimental import pallas as pl
from jax.experimental.pallas import tpu as pltpu


# ----------------------------- kernels ------------------------------------- #

def _fused_downsample_kernel(w_ref, b_ref, xt_ref, xs_ref, ot_ref, os_ref):
    """Channel-major fused 1x1-conv + folded BN for two same-shape features.

    w_ref:  (C_out, C_in) bf16 folded weight (grid-invariant, resident)
    b_ref:  (C_out, 1)    f32 folded BN bias
    xt/xs:  (C_in, tpix)  f32 activation block (cast to bf16 in-kernel)
    ot/os:  (C_out, tpix) f32 output block
    """
    w = w_ref[...]
    b = b_ref[...]
    yt = jnp.dot(w, xt_ref[...].astype(jnp.bfloat16),
                 preferred_element_type=jnp.float32)
    ot_ref[...] = (yt + b).astype(ot_ref.dtype)
    ys = jnp.dot(w, xs_ref[...].astype(jnp.bfloat16),
                 preferred_element_type=jnp.float32)
    os_ref[...] = (ys + b).astype(os_ref.dtype)


def _single_downsample_kernel(w_ref, b_ref, x_ref, o_ref):
    w = w_ref[...]
    y = jnp.dot(w, x_ref[...].astype(jnp.bfloat16),
                preferred_element_type=jnp.float32)
    o_ref[...] = (y + b_ref[...]).astype(o_ref.dtype)


# ----------------------------- wrappers ------------------------------------ #

def _pick_pixel_tile(hw):
    """Largest of (512, 256, 128) dividing hw, else full extent (no padding)."""
    if hw % 128 != 0:
        return hw
    for cand in (512, 256, 128):
        if hw % cand == 0:
            return cand
    return hw


def _downsample_fused(x_t, x_s, w_fold, bias_col):
    """x_t, x_s: (N, C_in, HW) f32, same shape. Returns two (N, C_out, HW) f32."""
    n, c_in, hw = x_t.shape
    c_out = w_fold.shape[0]
    tpix = _pick_pixel_tile(hw)
    grid = (n, hw // tpix)

    w_spec = pl.BlockSpec((c_out, c_in), lambda i, p: (0, 0))
    b_spec = pl.BlockSpec((c_out, 1), lambda i, p: (0, 0))
    x_spec = pl.BlockSpec((None, c_in, tpix), lambda i, p: (i, 0, p))
    o_spec = pl.BlockSpec((None, c_out, tpix), lambda i, p: (i, 0, p))

    return pl.pallas_call(
        _fused_downsample_kernel,
        out_shape=(jax.ShapeDtypeStruct((n, c_out, hw), jnp.float32),
                   jax.ShapeDtypeStruct((n, c_out, hw), jnp.float32)),
        grid_spec=pltpu.PrefetchScalarGridSpec(
            num_scalar_prefetch=0,
            grid=grid,
            in_specs=[w_spec, b_spec, x_spec, x_spec],
            out_specs=[o_spec, o_spec],
        ),
        compiler_params=pltpu.CompilerParams(
            dimension_semantics=("parallel", "parallel")),
    )(w_fold, bias_col, x_t, x_s)


def _downsample_single(x, w_fold, bias_col):
    """x: (N, C_in, HW) f32. Returns (N, C_out, HW) f32."""
    n, c_in, hw = x.shape
    c_out = w_fold.shape[0]
    tpix = _pick_pixel_tile(hw)
    grid = (n, hw // tpix)

    return pl.pallas_call(
        _single_downsample_kernel,
        out_shape=jax.ShapeDtypeStruct((n, c_out, hw), jnp.float32),
        grid_spec=pltpu.PrefetchScalarGridSpec(
            num_scalar_prefetch=0,
            grid=grid,
            in_specs=[pl.BlockSpec((c_out, c_in), lambda i, p: (0, 0)),
                      pl.BlockSpec((c_out, 1), lambda i, p: (0, 0)),
                      pl.BlockSpec((None, c_in, tpix), lambda i, p: (i, 0, p))],
            out_specs=pl.BlockSpec((None, c_out, tpix), lambda i, p: (i, 0, p)),
        ),
        compiler_params=pltpu.CompilerParams(
            dimension_semantics=("parallel", "parallel")),
    )(w_fold, bias_col, x)


def _prepare_downsample_params(conv_w, bn_gamma, bn_beta, bn_mean, bn_var,
                               eps=1e-5):
    """Fold eval-mode BN into the 1x1-conv weight (f32 fold, then bf16 cast)."""
    c_out, c_in = conv_w.shape[:2]
    inv_std = 1.0 / jnp.sqrt(bn_var.astype(jnp.float32) + eps)
    scale = bn_gamma.astype(jnp.float32) * inv_std                      # (C_out,)
    bias = bn_beta.astype(jnp.float32) - bn_mean.astype(jnp.float32) * scale
    # PyTorch conv weight (C_out, C_in, 1, 1) -> (C_out, C_in): no transpose
    # needed for the channel-major matmul.
    w_mat = conv_w.reshape(c_out, c_in).astype(jnp.float32)
    w_fold = (w_mat * scale[:, None]).astype(jnp.bfloat16)
    bias_col = bias.reshape(c_out, 1)
    return w_fold, bias_col


@jax.jit
def merged_model_forward(template_feature_last, search_feature_last, params):
    """MergedModel.forward tail:
         template_feature = self.downsample(template_feature[-1])
         search_feature   = self.downsample(skipInfo[-1])
    """
    # TODO(synk): rpn_pred_mask = self.rest(f=skipInfo, corr_feature=best_score)
    #             omitted: Refine() source is not available.
    conv_w, bn_gamma, bn_beta, bn_mean, bn_var = params
    w_fold, bias_col = _prepare_downsample_params(
        conv_w, bn_gamma, bn_beta, bn_mean, bn_var)

    nt, ct, ht, wt = template_feature_last.shape
    ns, cs, hs, ws = search_feature_last.shape
    x_t = template_feature_last.reshape(nt, ct, ht * wt)   # pure reshape
    x_s = search_feature_last.reshape(ns, cs, hs * ws)     # pure reshape

    if x_t.shape == x_s.shape:
        y_t, y_s = _downsample_fused(x_t, x_s, w_fold, bias_col)
    else:
        y_t = _downsample_single(x_t, w_fold, bias_col)
        y_s = _downsample_single(x_s, w_fold, bias_col)

    c_out = w_fold.shape[0]
    template_feature = y_t.reshape(nt, c_out, ht, wt)       # pure reshape
    search_feature = y_s.reshape(ns, c_out, hs, ws)         # pure reshape
    return template_feature, search_feature


# ----------------------------- references ---------------------------------- #

def _reference_downsample(x_nchw, conv_w, g, b, m, v, eps=1e-5):
    """Full-f32 plain-JAX reference (conv1x1 + eval BN)."""
    c_out, c_in = conv_w.shape[:2]
    y = jnp.einsum("nchw,oc->nohw", x_nchw, conv_w.reshape(c_out, c_in))
    inv_std = 1.0 / jnp.sqrt(v + eps)
    return (y - m[None, :, None, None]) * (g * inv_std)[None, :, None, None] \
        + b[None, :, None, None]


def _reference_downsample_bf16(x_nchw, w_fold_bf16, bias_col):
    """Reference matching the kernel numerics (bf16 operands, f32 accumulate)."""
    c_out, _ = w_fold_bf16.shape
    xb = x_nchw.astype(jnp.bfloat16).astype(jnp.float32)
    wb = w_fold_bf16.astype(jnp.float32)
    y = jnp.einsum("nchw,oc->nohw", xb, wb)
    return y + bias_col.reshape(1, c_out, 1, 1)


# ------------------------------- main --------------------------------------- #

if __name__ == "__main__":
    key = jax.random.PRNGKey(0)
    k1, k2, k3, k4, k5, k6, k7 = jax.random.split(key, 7)

    B, C_IN, H, W = 2, 1024, 8, 8   # channel dims fixed by the module (1024 -> 256)
    C_OUT = 256

    # Stand-ins for the outputs of dimppart.forward_merged (not translatable).
    template_feature_last = jax.random.normal(k1, (B, C_IN, H, W), jnp.float32)
    search_feature_last = jax.random.normal(k2, (B, C_IN, H, W), jnp.float32)

    # Deterministic synthetic parameters for self.downsample.
    conv_w = 0.02 * jax.random.normal(k3, (C_OUT, C_IN, 1, 1), jnp.float32)
    bn_gamma = 1.0 + 0.1 * jax.random.normal(k4, (C_OUT,), jnp.float32)
    bn_beta = 0.1 * jax.random.normal(k5, (C_OUT,), jnp.float32)
    bn_mean = 0.05 * jax.random.normal(k6, (C_OUT,), jnp.float32)
    bn_var = jnp.abs(1.0 + 0.1 * jax.random.normal(k7, (C_OUT,), jnp.float32))

    params = (conv_w, bn_gamma, bn_beta, bn_mean, bn_var)

    t_out, s_out = merged_model_forward(
        template_feature_last, search_feature_last, params)
    jax.block_until_ready((t_out, s_out))

    assert t_out.shape == (B, C_OUT, H, W) and s_out.shape == (B, C_OUT, H, W)

    # Tight check: same bf16-rounded folded weight / activations, f32 accumulate.
    w_fold, bias_col = _prepare_downsample_params(
        conv_w, bn_gamma, bn_beta, bn_mean, bn_var)
    t_ref_bf = _reference_downsample_bf16(template_feature_last, w_fold, bias_col)
    s_ref_bf = _reference_downsample_bf16(search_feature_last, w_fold, bias_col)
    assert jnp.allclose(t_out, t_ref_bf, atol=2e-3, rtol=2e-3)
    assert jnp.allclose(s_out, s_ref_bf, atol=2e-3, rtol=2e-3)

    # Loose check against the full-f32 reference (bf16 rounding only).
    t_ref = _reference_downsample(template_feature_last, *params)
    s_ref = _reference_downsample(search_feature_last, *params)
    assert jnp.allclose(t_out, t_ref, atol=5e-2, rtol=5e-2)
    assert jnp.allclose(s_out, s_ref, atol=5e-2, rtol=5e-2)

    print("KERNEL_OK")
</pallas_src>

<mosaic_0001>
module attributes {stable_mosaic.version = 11 : i64} {
  func.func @_fused_downsample_kernel(%arg0: i32, %arg1: i32, %arg2: memref<256x1024xbf16, #tpu.memory_space<vmem>>, %arg3: memref<256x1xf32, #tpu.memory_space<vmem>>, %arg4: memref<1x1024x64xf32, #tpu.memory_space<vmem>>, %arg5: memref<1x1024x64xf32, #tpu.memory_space<vmem>>, %arg6: memref<1x256x64xf32, #tpu.memory_space<vmem>>, %arg7: memref<1x256x64xf32, #tpu.memory_space<vmem>>) attributes {dimension_semantics = [#tpu.dimension_semantics<parallel>, #tpu.dimension_semantics<parallel>], iteration_bounds = array<i64: 2, 1>, scalar_prefetch = 0 : i64, scratch_operands = 0 : i64, tpu.core_type = #tpu.core_type<tc>, window_params = [{pipeline_mode = #tpu.pipeline_mode<synchronous>, transform_indices = @transform_0, window_bounds = array<i64: 256, 1024>}, {pipeline_mode = #tpu.pipeline_mode<synchronous>, transform_indices = @transform_1, window_bounds = array<i64: 256, 1>}, {transform_indices = @transform_2, window_bounds = array<i64: 1, 1024, 64>}, {transform_indices = @transform_3, window_bounds = array<i64: 1, 1024, 64>}, {transform_indices = @transform_4, window_bounds = array<i64: 1, 256, 64>}, {transform_indices = @transform_5, window_bounds = array<i64: 1, 256, 64>}]} {
    %c0 = arith.constant 0 : index
    %c0_0 = arith.constant 0 : index
    %0 = vector.load %arg2[%c0, %c0_0] : memref<256x1024xbf16, #tpu.memory_space<vmem>>, vector<256x1024xbf16>
    %c0_1 = arith.constant 0 : index
    %c0_2 = arith.constant 0 : index
    %1 = vector.load %arg3[%c0_1, %c0_2] : memref<256x1xf32, #tpu.memory_space<vmem>>, vector<256x1xf32>
    %c0_3 = arith.constant 0 : index
    %c0_4 = arith.constant 0 : index
    %c0_5 = arith.constant 0 : index
    %2 = vector.load %arg4[%c0_3, %c0_4, %c0_5] : memref<1x1024x64xf32, #tpu.memory_space<vmem>>, vector<1x1024x64xf32>
    %3 = vector.shape_cast %2 : vector<1x1024x64xf32> to vector<1024x64xf32>
    %4 = arith.truncf %3 : vector<1024x64xf32> to vector<1024x64xbf16>
    %cst = arith.constant dense<0.000000e+00> : vector<256x64xf32>
    %5 = tpu.matmul %0, %4, %cst {dimension_numbers = #tpu.dot_dimension_numbers<[1], [0], [0], [1], [0, 0, 1, 1], [], []>} : vector<256x1024xbf16>, vector<1024x64xbf16>, vector<256x64xf32> -> vector<256x64xf32>
    %6 = vector.broadcast %1 : vector<256x1xf32> to vector<256x64xf32>
    %7 = arith.addf %5, %6 : vector<256x64xf32>
    %c0_6 = arith.constant 0 : index
    %c0_7 = arith.constant 0 : index
    %c0_8 = arith.constant 0 : index
    %8 = vector.load %arg6[%c0_6, %c0_7, %c0_8] : memref<1x256x64xf32, #tpu.memory_space<vmem>>, vector<1x256x64xf32>
    %9 = vector.shape_cast %8 : vector<1x256x64xf32> to vector<256x64xf32>
    %10 = vector.shape_cast %7 : vector<256x64xf32> to vector<1x256x64xf32>
    tpu.vector_store %arg6[%c0_6, %c0_7, %c0_8], %10 {strides = array<i32>} : memref<1x256x64xf32, #tpu.memory_space<vmem>>, vector<1x256x64xf32>,
    %c0_9 = arith.constant 0 : index
    %c0_10 = arith.constant 0 : index
    %c0_11 = arith.constant 0 : index
    %11 = vector.load %arg5[%c0_9, %c0_10, %c0_11] : memref<1x1024x64xf32, #tpu.memory_space<vmem>>, vector<1x1024x64xf32>
    %12 = vector.shape_cast %11 : vector<1x1024x64xf32> to vector<1024x64xf32>
    %13 = arith.truncf %12 : vector<1024x64xf32> to vector<1024x64xbf16>
    %cst_12 = arith.constant dense<0.000000e+00> : vector<256x64xf32>
    %14 = tpu.matmul %0, %13, %cst_12 {dimension_numbers = #tpu.dot_dimension_numbers<[1], [0], [0], [1], [0, 0, 1, 1], [], []>} : vector<256x1024xbf16>, vector<1024x64xbf16>, vector<256x64xf32> -> vector<256x64xf32>
    %15 = vector.broadcast %1 : vector<256x1xf32> to vector<256x64xf32>
    %16 = arith.addf %14, %15 : vector<256x64xf32>
    %c0_13 = arith.constant 0 : index
    %c0_14 = arith.constant 0 : index
    %c0_15 = arith.constant 0 : index
    %17 = vector.load %arg7[%c0_13, %c0_14, %c0_15] : memref<1x256x64xf32, #tpu.memory_space<vmem>>, vector<1x256x64xf32>
    %18 = vector.shape_cast %17 : vector<1x256x64xf32> to vector<256x64xf32>
    %19 = vector.shape_cast %16 : vector<256x64xf32> to vector<1x256x64xf32>
    tpu.vector_store %arg7[%c0_13, %c0_14, %c0_15], %19 {strides = array<i32>} : memref<1x256x64xf32, #tpu.memory_space<vmem>>, vector<1x256x64xf32>,
    return
  }
  func.func @transform_0(%arg0: i32, %arg1: i32) -> (i32, i32) {
    %c0_i32 = arith.constant 0 : i32
    %c0_i32_0 = arith.constant 0 : i32
    %c0_i32_1 = arith.constant 0 : i32
    return %c0_i32, %c0_i32_0 : i32, i32
  }
  func.func @transform_1(%arg0: i32, %arg1: i32) -> (i32, i32) {
    %c0_i32 = arith.constant 0 : i32
    %c0_i32_0 = arith.constant 0 : i32
    %c0_i32_1 = arith.constant 0 : i32
    return %c0_i32, %c0_i32_0 : i32, i32
  }
  func.func @transform_2(%arg0: i32, %arg1: i32) -> (i32, i32, i32) {
    %c0_i32 = arith.constant 0 : i32
    %c0_i32_0 = arith.constant 0 : i32
    return %arg0, %c0_i32, %arg1 : i32, i32, i32
  }
  func.func @transform_3(%arg0: i32, %arg1: i32) -> (i32, i32, i32) {
    %c0_i32 = arith.constant 0 : i32
    %c0_i32_0 = arith.constant 0 : i32
    return %arg0, %c0_i32, %arg1 : i32, i32, i32
  }
  func.func @transform_4(%arg0: i32, %arg1: i32) -> (i32, i32, i32) {
    %c0_i32 = arith.constant 0 : i32
    %c0_i32_0 = arith.constant 0 : i32
    return %arg0, %c0_i32, %arg1 : i32, i32, i32
  }
  func.func @transform_5(%arg0: i32, %arg1: i32) -> (i32, i32, i32) {
    %c0_i32 = arith.constant 0 : i32
    %c0_i32_0 = arith.constant 0 : i32
    return %arg0, %c0_i32, %arg1 : i32, i32, i32
  }
}

</mosaic_0001>

<llo_original>
// kernel: merged_model_forward.1
$region0: #{merged_model_forward.1}
  #allocation0 [shape = 'u32[]', space=smem, size = 0x4, offset = 0x4, fixed_abs, tag = 'smem constant byte address 0x4 - core index']
  #allocation1 [shape = 'u32[144,128]{1,0:T(1,128)}', space=vmem, size = 0x12000, scoped, tag = 'internal scratch']
  %s0 = inlined_call_operand.vmem [shape: bf16[256,1024], index: 0, kind: input, shape index: {}]
  %s1 = inlined_call_operand.vmem [shape: f32[256,1], index: 1, kind: input, shape index: {}]
  %s2 = inlined_call_operand.vmem [shape: f32[2,1024,64], index: 2, kind: input, shape index: {}]
  %s3 = inlined_call_operand.vmem [shape: f32[2,1024,64], index: 3, kind: input, shape index: {}]
  %s4 = inlined_call_operand.vmem [shape: f32[2,256,64], index: 4, kind: output, shape index: {0}]
  %s5 = inlined_call_operand.vmem [shape: f32[2,256,64], index: 5, kind: output, shape index: {1}]
  %6 = xla_tuple %s4, %s5
  %s7 = sld [smem:[#allocation0]]
  $region57: #{merged_model_forward.1} parent=0
    _
  %s9 = ssub.s32 1, %s7
  %s10 = scalar_select 0, %s9, %s7
  loop: start=0, step=1, limit=4
  $region2: #{merged_model_forward.1} parent=0 // loop_pre_header
    _
  $region3: #{merged_model_forward.1} parent=0 // loop_header
    %s12 = sphi 0, %s16
    %p13 = scmp.ge.s32.totalorder %s12, 4
    %s19 = sphi 0, %s31
    %s20 = sphi 0, %s27
    %s21 = sphi 0, %s19
    %s22 = sphi 0, %s20
    %s23 = sphi 0, %s21
    %s24 = sphi 0, %s22
    %s32 = sphi 0, %s32
    %s34 = sphi 0, %s32
    %s35 = sphi 0, %s34
    %s49 = sphi 0, %s35
    %s53 = sphi 0, %s53
    %s55 = sphi 0, %s53
    %s56 = sphi 0, %s55
    %s70 = sphi 0, %s56
    %s78 = sphi 0, %s80
    %s81 = sphi 0, %s78
    %s82 = sphi 0, %s81
    %s98 = sphi 0, %s82
    %s106 = sphi 0, %s108
    %s109 = sphi 0, %s106
    %s110 = sphi 0, %s109
    %s126 = sphi 0, %s110
    %s134 = sphi 0, %s136
    %s137 = sphi 0, %s134
    %s138 = sphi 0, %s137
    %s154 = sphi 0, %s138
    %s162 = sphi 0, %s164
    %s165 = sphi 0, %s162
    %s166 = sphi 0, %s165
    %s182 = sphi 0, %s166
  $region4: #{merged_model_forward.1} parent=0 // loop_header_branch
    %15 = sbr.rel (%p13) target = $region8
  $region5: #{merged_model_forward.1} parent=0 // loop_body
    %s17 = ssub.s32 %s12, 1
    %s18 = ssub.s32 %s12, 2
    %s25 = sadd.s32 1, %s20
    %p26 = scmp.ge.s32.totalorder %s25, 1
    %s27 = scalar_select %p26, 0, %s25
    %s28 = sadd.s32 1, %s19
    %s29 = scalar_select %p26, %s28, %s19
    %p30 = scmp.ge.s32.totalorder %s29, 2
    %s31 = scalar_select %p30, 0, %s29
    %s33 = sadd.s32 %s32, 1
    %p36 = scmp.eq.s32.totalorder %s12, 1
    %p37 = scmp.ne.s32.totalorder %s32, %s34
    %p38 = scmp.eq.s32.totalorder %s12, 0
    %p39 = por %p37, %p38
    %p40 = scmp.ne.s32.totalorder %s32, %s34
    %p41 = scmp.eq.s32.totalorder %s17, 1
    %p42 = por %p40, %p41
    %p43 = scmp.ne.s32.totalorder %s34, %s35
    %p44 = scmp.eq.s32.totalorder %s17, 0
    %p45 = por %p43, %p44
    %p46 = scmp.ne.s32.totalorder %s34, %s35
    %p47 = scmp.eq.s32.totalorder %s18, 1
    %p48 = por %p46, %p47
    %p50 = scmp.ne.s32.totalorder %s35, %s49
    %p51 = scmp.eq.s32.totalorder %s18, 0
    %p52 = por %p50, %p51
    %s54 = sadd.s32 %s53, 1
    %p57 = scmp.eq.s32.totalorder %s12, 1
    %p58 = scmp.ne.s32.totalorder %s53, %s55
    %p59 = scmp.eq.s32.totalorder %s12, 0
    %p60 = por %p58, %p59
    %p61 = scmp.ne.s32.totalorder %s53, %s55
    %p62 = scmp.eq.s32.totalorder %s17, 1
    %p63 = por %p61, %p62
    %p64 = scmp.ne.s32.totalorder %s55, %s56
    %p65 = scmp.eq.s32.totalorder %s17, 0
    %p66 = por %p64, %p65
    %p67 = scmp.ne.s32.totalorder %s55, %s56
    %p68 = scmp.eq.s32.totalorder %s18, 1
    %p69 = por %p67, %p68
    %p71 = scmp.ne.s32.totalorder %s56, %s70
    %p72 = scmp.eq.s32.totalorder %s18, 0
    %p73 = por %p71, %p72
    %s74 = ssub.s32 %s19, %s31
    %s75 = ssub.s32 %s20, %s27
    %s76 = sor.u32 %s74, %s75
    %p77 = scmp.eq.s32.totalorder %s76, 0
    %s79 = sadd.s32 %s78, 1
    %s80 = scalar_select %p77, %s78, %s79
    %p83 = pneg %p77
    %p84 = scmp.eq.s32.totalorder %s12, 1
    %p85 = por %p83, %p84
    %p86 = scmp.ne.s32.totalorder %s78, %s81
    %p87 = scmp.eq.s32.totalorder %s12, 0
    %p88 = por %p86, %p87
    %p89 = scmp.ne.s32.totalorder %s78, %s81
    %p90 = scmp.eq.s32.totalorder %s17, 1
    %p91 = por %p89, %p90
    %p92 = scmp.ne.s32.totalorder %s81, %s82
    %p93 = scmp.eq.s32.totalorder %s17, 0
    %p94 = por %p92, %p93
    %p95 = scmp.ne.s32.totalorder %s81, %s82
    %p96 = scmp.eq.s32.totalorder %s18, 1
    %p97 = por %p95, %p96
    %p99 = scmp.ne.s32.totalorder %s82, %s98
    %p100 = scmp.eq.s32.totalorder %s18, 0
    %p101 = por %p99, %p100
    %s102 = ssub.s32 %s19, %s31
    %s103 = ssub.s32 %s20, %s27
    %s104 = sor.u32 %s102, %s103
    %p105 = scmp.eq.s32.totalorder %s104, 0
    %s107 = sadd.s32 %s106, 1
    %s108 = scalar_select %p105, %s106, %s107
    %p111 = pneg %p105
    %p112 = scmp.eq.s32.totalorder %s12, 1
    %p113 = por %p111, %p112
    %p114 = scmp.ne.s32.totalorder %s106, %s109
    %p115 = scmp.eq.s32.totalorder %s12, 0
    %p116 = por %p114, %p115
    %p117 = scmp.ne.s32.totalorder %s106, %s109
    %p118 = scmp.eq.s32.totalorder %s17, 1
    %p119 = por %p117, %p118
    %p120 = scmp.ne.s32.totalorder %s109, %s110
    %p121 = scmp.eq.s32.totalorder %s17, 0
    %p122 = por %p120, %p121
    %p123 = scmp.ne.s32.totalorder %s109, %s110
    %p124 = scmp.eq.s32.totalorder %s18, 1
    %p125 = por %p123, %p124
    %p127 = scmp.ne.s32.totalorder %s110, %s126
    %p128 = scmp.eq.s32.totalorder %s18, 0
    %p129 = por %p127, %p128
    %s130 = ssub.s32 %s19, %s31
    %s131 = ssub.s32 %s20, %s27
    %s132 = sor.u32 %s130, %s131
    %p133 = scmp.eq.s32.totalorder %s132, 0
    %s135 = sadd.s32 %s134, 1
    %s136 = scalar_select %p133, %s134, %s135
    %p139 = pneg %p133
    %p140 = scmp.eq.s32.totalorder %s12, 1
    %p141 = por %p139, %p140
    %p142 = scmp.ne.s32.totalorder %s134, %s137
    %p143 = scmp.eq.s32.totalorder %s12, 0
    %p144 = por %p142, %p143
    %p145 = scmp.ne.s32.totalorder %s134, %s137
    %p146 = scmp.eq.s32.totalorder %s17, 1
    %p147 = por %p145, %p146
    %p148 = scmp.ne.s32.totalorder %s137, %s138
    %p149 = scmp.eq.s32.totalorder %s17, 0
    %p150 = por %p148, %p149
    %p151 = scmp.ne.s32.totalorder %s137, %s138
    %p152 = scmp.eq.s32.totalorder %s18, 1
    %p153 = por %p151, %p152
    %p155 = scmp.ne.s32.totalorder %s138, %s154
    %p156 = scmp.eq.s32.totalorder %s18, 0
    %p157 = por %p155, %p156
    %s158 = ssub.s32 %s19, %s31
    %s159 = ssub.s32 %s20, %s27
    %s160 = sor.u32 %s158, %s159
    %p161 = scmp.eq.s32.totalorder %s160, 0
    %s163 = sadd.s32 %s162, 1
    %s164 = scalar_select %p161, %s162, %s163
    %p167 = pneg %p161
    %p168 = scmp.eq.s32.totalorder %s12, 1
    %p169 = por %p167, %p168
    %p170 = scmp.ne.s32.totalorder %s162, %s165
    %p171 = scmp.eq.s32.totalorder %s12, 0
    %p172 = por %p170, %p171
    %p173 = scmp.ne.s32.totalorder %s162, %s165
    %p174 = scmp.eq.s32.totalorder %s17, 1
    %p175 = por %p173, %p174
    %p176 = scmp.ne.s32.totalorder %s165, %s166
    %p177 = scmp.eq.s32.totalorder %s17, 0
    %p178 = por %p176, %p177
    %p179 = scmp.ne.s32.totalorder %s165, %s166
    %p180 = scmp.eq.s32.totalorder %s18, 1
    %p181 = por %p179, %p180
    %p183 = scmp.ne.s32.totalorder %s166, %s182
    %p184 = scmp.eq.s32.totalorder %s18, 0
    %p185 = por %p183, %p184
    %p186 = scmp.le.s32.totalorder 1, %s12
    %p187 = scmp.lt.s32.totalorder %s12, 3
    %p188 = pnand %p186, %p187
    %p189 = pneg %p188
    // Predicated region
    $region9: #{merged_model_forward.1} parent=5 // pred_check
      _
    $region10: #{merged_model_forward.1} parent=5 // pred_check_branch
      %191 = sbr.rel (%p188) target = $region12
    $region11: #{merged_model_forward.1} parent=5 // pred_region
      %s192 = ssub.s32 %s12, 1
      // Predicated region
      $region13: #{merged_model_forward.1} parent=11 // pred_check
        %p193 = pneg %p45
      $region14: #{merged_model_forward.1} parent=11 // pred_check_branch
        %195 = sbr.rel (%p193) target = $region16
      $region15: #{merged_model_forward.1} parent=11 // pred_region
        _
      $region16: #{merged_model_forward.1} parent=11 // pred_fallthru
        _
      // Predicated region
      $region17: #{merged_model_forward.1} parent=11 // pred_check
        %p196 = pneg %p66
      $region18: #{merged_model_forward.1} parent=11 // pred_check_branch
        %198 = sbr.rel (%p196) target = $region20
      $region19: #{merged_model_forward.1} parent=11 // pred_region
        _
      $region20: #{merged_model_forward.1} parent=11 // pred_fallthru
        _
    $region12: #{merged_model_forward.1} parent=5 // pred_fallthru
      _
    %p199 = scmp.lt.s32.totalorder %s12, 2
    // Predicated region
    $region21: #{merged_model_forward.1} parent=5 // pred_check
      %p200 = pneg %p199
    $region22: #{merged_model_forward.1} parent=5 // pred_check_branch
      %202 = sbr.rel (%p200) target = $region24
    $region23: #{merged_model_forward.1} parent=5 // pred_region
      // Predicated region
      $region25: #{merged_model_forward.1} parent=23 // pred_check
        %p203 = pneg %p88
      $region26: #{merged_model_forward.1} parent=23 // pred_check_branch
        %205 = sbr.rel (%p203) target = $region28
      $region27: #{merged_model_forward.1} parent=23 // pred_region
        %p206 = scmp.lt.s32.totalorder %s19, 1
        %s207 = scalar_select %p206, %s19, 1
        %p208 = scmp.lt.s32.totalorder %s20, 0
        %s209 = scalar_select %p208, %s20, 0
        %s210 = smul.addr %s207, 128
        %s211 = sadd.s32 %s209, %s210
        %s212 = smul.addr %s211, 8
        %s213 = scalar_lea.vmem %s2, %s212
      $region28: #{merged_model_forward.1} parent=23 // pred_fallthru
        _
      // Predicated region
      $region29: #{merged_model_forward.1} parent=23 // pred_check
        %p214 = pneg %p116
      $region30: #{merged_model_forward.1} parent=23 // pred_check_branch
        %216 = sbr.rel (%p214) target = $region32
      $region31: #{merged_model_forward.1} parent=23 // pred_region
        %p217 = scmp.lt.s32.totalorder %s19, 1
        %s218 = scalar_select %p217, %s19, 1
        %p219 = scmp.lt.s32.totalorder %s20, 0
        %s220 = scalar_select %p219, %s20, 0
        %s221 = smul.addr %s218, 128
        %s222 = sadd.s32 %s220, %s221
        %s223 = smul.addr %s222, 8
        %s224 = scalar_lea.vmem %s3, %s223
      $region32: #{merged_model_forward.1} parent=23 // pred_fallthru
        _
    $region24: #{merged_model_forward.1} parent=5 // pred_fallthru
      _
    %p225 = scmp.le.s32.totalorder 1, %s12
    %p226 = scmp.lt.s32.totalorder %s12, 3
    %p227 = pnand %p225, %p226
    %p228 = pneg %p227
    // Predicated region
    $region33: #{merged_model_forward.1} parent=5 // pred_check
      _
    $region34: #{merged_model_forward.1} parent=5 // pred_check_branch
      %230 = sbr.rel (%p227) target = $region36
    $region35: #{merged_model_forward.1} parent=5 // pred_region
      %s231 = ssub.s32 %s12, 1
      %p232 = pneg %p45
      %p233 = pneg %p42
      %p234 = pneg %p66
      %p235 = pneg %p63
      %p236 = scmp.lt.s32.totalorder %s21, 1
      %s237 = scalar_select %p236, %s21, 1
      %p238 = scmp.lt.s32.totalorder %s22, 0
      %s239 = scalar_select %p238, %s22, 0
      %s240 = smul.addr %s237, 128
      %s241 = sadd.s32 %s239, %s240
      %s242 = smul.addr %s241, 8
      %s243 = scalar_lea.vmem %s2, %s242
      %p244 = pneg %p94
      %p245 = pneg %p91
      %p246 = scmp.lt.s32.totalorder %s21, 1
      %s247 = scalar_select %p246, %s21, 1
      %p248 = scmp.lt.s32.totalorder %s22, 0
      %s249 = scalar_select %p248, %s22, 0
      %s250 = smul.addr %s247, 128
      %s251 = sadd.s32 %s249, %s250
      %s252 = smul.addr %s251, 8
      %s253 = scalar_lea.vmem %s3, %s252
      %p254 = pneg %p122
      %p255 = pneg %p119
      %p256 = pneg %p150
      %p257 = pneg %p147
      %p258 = scmp.lt.s32.totalorder %s21, 1
      %s259 = scalar_select %p258, %s21, 1
      %p260 = scmp.lt.s32.totalorder %s22, 0
      %s261 = scalar_select %p260, %s22, 0
      %s262 = smul.addr %s259, 32
      %s263 = sadd.s32 %s261, %s262
      %s264 = smul.addr %s263, 8
      %s265 = scalar_lea.vmem %s4, %s264
      %p266 = pneg %p178
      %p267 = pneg %p175
      %p268 = scmp.lt.s32.totalorder %s21, 1
      %s269 = scalar_select %p268, %s21, 1
      %p270 = scmp.lt.s32.totalorder %s22, 0
      %s271 = scalar_select %p270, %s22, 0
      %s272 = smul.addr %s269, 32
      %s273 = sadd.s32 %s271, %s272
      %s274 = smul.addr %s273, 8
      %s275 = scalar_lea.vmem %s5, %s274
      %p276 = scmp.lt.s32.totalorder %s21, 1
      %s277 = scalar_select %p276, %s21, 1
      %p278 = scmp.lt.s32.totalorder %s22, 0
      %s279 = scalar_select %p278, %s22, 0
      %s280 = smul.addr %s277, 128
      %s281 = sadd.s32 %s279, %s280
      %s282 = smul.addr %s281, 8
      %s283 = scalar_lea.vmem %s2, %s282
      %p284 = scmp.lt.s32.totalorder %s21, 1
      %s285 = scalar_select %p284, %s21, 1
      %p286 = scmp.lt.s32.totalorder %s22, 0
      %s287 = scalar_select %p286, %s22, 0
      %s288 = smul.addr %s285, 128
      %s289 = sadd.s32 %s287, %s288
      %s290 = smul.addr %s289, 8
      %s291 = scalar_lea.vmem %s3, %s290
      %p292 = scmp.lt.s32.totalorder %s21, 1
      %s293 = scalar_select %p292, %s21, 1
      %p294 = scmp.lt.s32.totalorder %s22, 0
      %s295 = scalar_select %p294, %s22, 0
      %s296 = smul.addr %s293, 32
      %s297 = sadd.s32 %s295, %s296
      %s298 = smul.addr %s297, 8
      %s299 = scalar_lea.vmem %s4, %s298
      %p300 = scmp.lt.s32.totalorder %s21, 1
      %s301 = scalar_select %p300, %s21, 1
      %p302 = scmp.lt.s32.totalorder %s22, 0
      %s303 = scalar_select %p302, %s22, 0
      %s304 = smul.addr %s301, 32
      %s305 = sadd.s32 %s303, %s304
      %s306 = smul.addr %s305, 8
      %s307 = scalar_lea.vmem %s5, %s306
      %v309 = vld [vmem:[%s0] sm:$0xff]
      %v310 = vld [vmem:[%s0 + $0x8] sm:$0xff]
      %v311 = vld [vmem:[%s0 + $0x10] sm:$0xff]
      %v312 = vld [vmem:[%s0 + $0x18] sm:$0xff]
      %v313 = vld [vmem:[%s0 + $0x20] sm:$0xff]
      %v314 = vld [vmem:[%s0 + $0x28] sm:$0xff]
      %v315 = vld [vmem:[%s0 + $0x30] sm:$0xff]
      %v316 = vld [vmem:[%s0 + $0x38] sm:$0xff]
      %v317 = vld [vmem:[%s0 + $0x40] sm:$0xff]
      %v318 = vld [vmem:[%s0 + $0x48] sm:$0xff]
      %v319 = vld [vmem:[%s0 + $0x50] sm:$0xff]
      %v320 = vld [vmem:[%s0 + $0x58] sm:$0xff]
      %v321 = vld [vmem:[%s0 + $0x60] sm:$0xff]
      %v322 = vld [vmem:[%s0 + $0x68] sm:$0xff]
      %v323 = vld [vmem:[%s0 + $0x70] sm:$0xff]
      %v324 = vld [vmem:[%s0 + $0x78] sm:$0xff]
      %v325 = vld [vmem:[%s0 + $0x80] sm:$0xff]
      %v326 = vld [vmem:[%s0 + $0x88] sm:$0xff]
      %v327 = vld [vmem:[%s0 + $0x90] sm:$0xff]
      %v328 = vld [vmem:[%s0 + $0x98] sm:$0xff]
      %v329 = vld [vmem:[%s0 + $0xa0] sm:$0xff]
      %v330 = vld [vmem:[%s0 + $0xa8] sm:$0xff]
      %v331 = vld [vmem:[%s0 + $0xb0] sm:$0xff]
      %v332 = vld [vmem:[%s0 + $0xb8] sm:$0xff]
      %v333 = vld [vmem:[%s0 + $0xc0] sm:$0xff]
      %v334 = vld [vmem:[%s0 + $0xc8] sm:$0xff]
      %v335 = vld [vmem:[%s0 + $0xd0] sm:$0xff]
      %v336 = vld [vmem:[%s0 + $0xd8] sm:$0xff]
      %v337 = vld [vmem:[%s0 + $0xe0] sm:$0xff]
      %v338 = vld [vmem:[%s0 + $0xe8] sm:$0xff]
      %v339 = vld [vmem:[%s0 + $0xf0] sm:$0xff]
      %v340 = vld [vmem:[%s0 + $0xf8] sm:$0xff]
      %v341 = vld [vmem:[%s0 + $0x100] sm:$0xff]
      %v342 = vld [vmem:[%s0 + $0x108] sm:$0xff]
      %v343 = vld [vmem:[%s0 + $0x110] sm:$0xff]
      %v344 = vld [vmem:[%s0 + $0x118] sm:$0xff]
      %v345 = vld [vmem:[%s0 + $0x120] sm:$0xff]
      %v346 = vld [vmem:[%s0 + $0x128] sm:$0xff]
      %v347 = vld [vmem:[%s0 + $0x130] sm:$0xff]
      %v348 = vld [vmem:[%s0 + $0x138] sm:$0xff]
      %v349 = vld [vmem:[%s0 + $0x140] sm:$0xff]
      %v350 = vld [vmem:[%s0 + $0x148] sm:$0xff]
      %v351 = vld [vmem:[%s0 + $0x150] sm:$0xff]
      %v352 = vld [vmem:[%s0 + $0x158] sm:$0xff]
      %v353 = vld [vmem:[%s0 + $0x160] sm:$0xff]
      %v354 = vld [vmem:[%s0 + $0x168] sm:$0xff]
      %v355 = vld [vmem:[%s0 + $0x170] sm:$0xff]
      %v356 = vld [vmem:[%s0 + $0x178] sm:$0xff]
      %v357 = vld [vmem:[%s0 + $0x180] sm:$0xff]
      %v358 = vld [vmem:[%s0 + $0x188] sm:$0xff]
      %v359 = vld [vmem:[%s0 + $0x190] sm:$0xff]
      %v360 = vld [vmem:[%s0 + $0x198] sm:$0xff]
      %v361 = vld [vmem:[%s0 + $0x1a0] sm:$0xff]
      %v362 = vld [vmem:[%s0 + $0x1a8] sm:$0xff]
      %v363 = vld [vmem:[%s0 + $0x1b0] sm:$0xff]
      %v364 = vld [vmem:[%s0 + $0x1b8] sm:$0xff]
      %v365 = vld [vmem:[%s0 + $0x1c0] sm:$0xff]
      %v366 = vld [vmem:[%s0 + $0x1c8] sm:$0xff]
      %v367 = vld [vmem:[%s0 + $0x1d0] sm:$0xff]
      %v368 = vld [vmem:[%s0 + $0x1d8] sm:$0xff]
      %v369 = vld [vmem:[%s0 + $0x1e0] sm:$0xff]
      %v370 = vld [vmem:[%s0 + $0x1e8] sm:$0xff]
      %v371 = vld [vmem:[%s0 + $0x1f0] sm:$0xff]
      %v372 = vld [vmem:[%s0 + $0x1f8] sm:$0xff]
      %v373 = vld [vmem:[%s0 + $0x200] sm:$0xff]
      %v374 = vld [vmem:[%s0 + $0x208] sm:$0xff]
      %v375 = vld [vmem:[%s0 + $0x210] sm:$0xff]
      %v376 = vld [vmem:[%s0 + $0x218] sm:$0xff]
      %v377 = vld [vmem:[%s0 + $0x220] sm:$0xff]
      %v378 = vld [vmem:[%s0 + $0x228] sm:$0xff]
      %v379 = vld [vmem:[%s0 + $0x230] sm:$0xff]
      %v380 = vld [vmem:[%s0 + $0x238] sm:$0xff]
      %v381 = vld [vmem:[%s0 + $0x240] sm:$0xff]
      %v382 = vld [vmem:[%s0 + $0x248] sm:$0xff]
      %v383 = vld [vmem:[%s0 + $0x250] sm:$0xff]
      %v384 = vld [vmem:[%s0 + $0x258] sm:$0xff]
      %v385 = vld [vmem:[%s0 + $0x260] sm:$0xff]
      %v386 = vld [vmem:[%s0 + $0x268] sm:$0xff]
      %v387 = vld [vmem:[%s0 + $0x270] sm:$0xff]
      %v388 = vld [vmem:[%s0 + $0x278] sm:$0xff]
      %v389 = vld [vmem:[%s0 + $0x280] sm:$0xff]
      %v390 = vld [vmem:[%s0 + $0x288] sm:$0xff]
      %v391 = vld [vmem:[%s0 + $0x290] sm:$0xff]
      %v392 = vld [vmem:[%s0 + $0x298] sm:$0xff]
      %v393 = vld [vmem:[%s0 + $0x2a0] sm:$0xff]
      %v394 = vld [vmem:[%s0 + $0x2a8] sm:$0xff]
      %v395 = vld [vmem:[%s0 + $0x2b0] sm:$0xff]
      %v396 = vld [vmem:[%s0 + $0x2b8] sm:$0xff]
      %v397 = vld [vmem:[%s0 + $0x2c0] sm:$0xff]
      %v398 = vld [vmem:[%s0 + $0x2c8] sm:$0xff]
      %v399 = vld [vmem:[%s0 + $0x2d0] sm:$0xff]
      %v400 = vld [vmem:[%s0 + $0x2d8] sm:$0xff]
      %v401 = vld [vmem:[%s0 + $0x2e0] sm:$0xff]
      %v402 = vld [vmem:[%s0 + $0x2e8] sm:$0xff]
      %v403 = vld [vmem:[%s0 + $0x2f0] sm:$0xff]
      %v404 = vld [vmem:[%s0 + $0x2f8] sm:$0xff]
      %v405 = vld [vmem:[%s0 + $0x300] sm:$0xff]
      %v406 = vld [vmem:[%s0 + $0x308] sm:$0xff]
      %v407 = vld [vmem:[%s0 + $0x310] sm:$0xff]
      %v408 = vld [vmem:[%s0 + $0x318] sm:$0xff]
      %v409 = vld [vmem:[%s0 + $0x320] sm:$0xff]
      %v410 = vld [vmem:[%s0 + $0x328] sm:$0xff]
      %v411 = vld [vmem:[%s0 + $0x330] sm:$0xff]
      %v412 = vld [vmem:[%s0 + $0x338] sm:$0xff]
      %v413 = vld [vmem:[%s0 + $0x340] sm:$0xff]
      %v414 = vld [vmem:[%s0 + $0x348] sm:$0xff]
      %v415 = vld [vmem:[%s0 + $0x350] sm:$0xff]
      %v416 = vld [vmem:[%s0 + $0x358] sm:$0xff]
      %v417 = vld [vmem:[%s0 + $0x360] sm:$0xff]
      %v418 = vld [vmem:[%s0 + $0x368] sm:$0xff]
      %v419 = vld [vmem:[%s0 + $0x370] sm:$0xff]
      %v420 = vld [vmem:[%s0 + $0x378] sm:$0xff]
      %v421 = vld [vmem:[%s0 + $0x380] sm:$0xff]
      %v422 = vld [vmem:[%s0 + $0x388] sm:$0xff]
      %v423 = vld [vmem:[%s0 + $0x390] sm:$0xff]
      %v424 = vld [vmem:[%s0 + $0x398] sm:$0xff]
      %v425 = vld [vmem:[%s0 + $0x3a0] sm:$0xff]
      %v426 = vld [vmem:[%s0 + $0x3a8] sm:$0xff]
      %v427 = vld [vmem:[%s0 + $0x3b0] sm:$0xff]
      %v428 = vld [vmem:[%s0 + $0x3b8] sm:$0xff]
      %v429 = vld [vmem:[%s0 + $0x3c0] sm:$0xff]
      %v430 = vld [vmem:[%s0 + $0x3c8] sm:$0xff]
      %v431 = vld [vmem:[%s0 + $0x3d0] sm:$0xff]
      %v432 = vld [vmem:[%s0 + $0x3d8] sm:$0xff]
      %v433 = vld [vmem:[%s0 + $0x3e0] sm:$0xff]
      %v434 = vld [vmem:[%s0 + $0x3e8] sm:$0xff]
      %v435 = vld [vmem:[%s0 + $0x3f0] sm:$0xff]
      %v436 = vld [vmem:[%s0 + $0x3f8] sm:$0xff]
      %v437 = vld [vmem:[%s1] sm:$0xff]
      %v438 = vld [vmem:[%s1 + $0x8] sm:$0xff]
      %v439 = vld [vmem:[%s1 + $0x10] sm:$0xff]
      %v440 = vld [vmem:[%s1 + $0x18] sm:$0xff]
      %v441 = vld [vmem:[%s1 + $0x20] sm:$0xff]
      %v442 = vld [vmem:[%s1 + $0x28] sm:$0xff]
      %v443 = vld [vmem:[%s1 + $0x30] sm:$0xff]
      %v444 = vld [vmem:[%s1 + $0x38] sm:$0xff]
      %v445 = vld [vmem:[%s1 + $0x40] sm:$0xff]
      %v446 = vld [vmem:[%s1 + $0x48] sm:$0xff]
      %v447 = vld [vmem:[%s1 + $0x50] sm:$0xff]
      %v448 = vld [vmem:[%s1 + $0x58] sm:$0xff]
      %v449 = vld [vmem:[%s1 + $0x60] sm:$0xff]
      %v450 = vld [vmem:[%s1 + $0x68] sm:$0xff]
      %v451 = vld [vmem:[%s1 + $0x70] sm:$0xff]
      %v452 = vld [vmem:[%s1 + $0x78] sm:$0xff]
      %v453 = vld [vmem:[%s1 + $0x80] sm:$0xff]
      %v454 = vld [vmem:[%s1 + $0x88] sm:$0xff]
      %v455 = vld [vmem:[%s1 + $0x90] sm:$0xff]
      %v456 = vld [vmem:[%s1 + $0x98] sm:$0xff]
      %v457 = vld [vmem:[%s1 + $0xa0] sm:$0xff]
      %v458 = vld [vmem:[%s1 + $0xa8] sm:$0xff]
      %v459 = vld [vmem:[%s1 + $0xb0] sm:$0xff]
      %v460 = vld [vmem:[%s1 + $0xb8] sm:$0xff]
      %v461 = vld [vmem:[%s1 + $0xc0] sm:$0xff]
      %v462 = vld [vmem:[%s1 + $0xc8] sm:$0xff]
      %v463 = vld [vmem:[%s1 + $0xd0] sm:$0xff]
      %v464 = vld [vmem:[%s1 + $0xd8] sm:$0xff]
      %v465 = vld [vmem:[%s1 + $0xe0] sm:$0xff]
      %v466 = vld [vmem:[%s1 + $0xe8] sm:$0xff]
      %v467 = vld [vmem:[%s1 + $0xf0] sm:$0xff]
      %v468 = vld [vmem:[%s1 + $0xf8] sm:$0xff]
      %v469 = vld [vmem:[%s283] sm:$0xff]
      %v470 = vld [vmem:[%s283 + $0x8] sm:$0xff]
      %v471 = vld [vmem:[%s283 + $0x10] sm:$0xff]
      %v472 = vld [vmem:[%s283 + $0x18] sm:$0xff]
      %v473 = vld [vmem:[%s283 + $0x20] sm:$0xff]
      %v474 = vld [vmem:[%s283 + $0x28] sm:$0xff]
      %v475 = vld [vmem:[%s283 + $0x30] sm:$0xff]
      %v476 = vld [vmem:[%s283 + $0x38] sm:$0xff]
      %v477 = vld [vmem:[%s283 + $0x40] sm:$0xff]
      %v478 = vld [vmem:[%s283 + $0x48] sm:$0xff]
      %v479 = vld [vmem:[%s283 + $0x50] sm:$0xff]
      %v480 = vld [vmem:[%s283 + $0x58] sm:$0xff]
      %v481 = vld [vmem:[%s283 + $0x60] sm:$0xff]
      %v482 = vld [vmem:[%s283 + $0x68] sm:$0xff]
      %v483 = vld [vmem:[%s283 + $0x70] sm:$0xff]
      %v484 = vld [vmem:[%s283 + $0x78] sm:$0xff]
      %v485 = vld [vmem:[%s283 + $0x80] sm:$0xff]
      %v486 = vld [vmem:[%s283 + $0x88] sm:$0xff]
      %v487 = vld [vmem:[%s283 + $0x90] sm:$0xff]
      %v488 = vld [vmem:[%s283 + $0x98] sm:$0xff]
      %v489 = vld [vmem:[%s283 + $0xa0] sm:$0xff]
      %v490 = vld [vmem:[%s283 + $0xa8] sm:$0xff]
      %v491 = vld [vmem:[%s283 + $0xb0] sm:$0xff]
      %v492 = vld [vmem:[%s283 + $0xb8] sm:$0xff]
      %v493 = vld [vmem:[%s283 + $0xc0] sm:$0xff]
      %v494 = vld [vmem:[%s283 + $0xc8] sm:$0xff]
      %v495 = vld [vmem:[%s283 + $0xd0] sm:$0xff]
      %v496 = vld [vmem:[%s283 + $0xd8] sm:$0xff]
      %v497 = vld [vmem:[%s283 + $0xe0] sm:$0xff]
      %v498 = vld [vmem:[%s283 + $0xe8] sm:$0xff]
      %v499 = vld [vmem:[%s283 + $0xf0] sm:$0xff]
      %v500 = vld [vmem:[%s283 + $0xf8] sm:$0xff]
      %v501 = vld [vmem:[%s283 + $0x100] sm:$0xff]
      %v502 = vld [vmem:[%s283 + $0x108] sm:$0xff]
      %v503 = vld [vmem:[%s283 + $0x110] sm:$0xff]
      %v504 = vld [vmem:[%s283 + $0x118] sm:$0xff]
      %v505 = vld [vmem:[%s283 + $0x120] sm:$0xff]
      %v506 = vld [vmem:[%s283 + $0x128] sm:$0xff]
      %v507 = vld [vmem:[%s283 + $0x130] sm:$0xff]
      %v508 = vld [vmem:[%s283 + $0x138] sm:$0xff]
      %v509 = vld [vmem:[%s283 + $0x140] sm:$0xff]
      %v510 = vld [vmem:[%s283 + $0x148] sm:$0xff]
      %v511 = vld [vmem:[%s283 + $0x150] sm:$0xff]
      %v512 = vld [vmem:[%s283 + $0x158] sm:$0xff]
      %v513 = vld [vmem:[%s283 + $0x160] sm:$0xff]
      %v514 = vld [vmem:[%s283 + $0x168] sm:$0xff]
      %v515 = vld [vmem:[%s283 + $0x170] sm:$0xff]
      %v516 = vld [vmem:[%s283 + $0x178] sm:$0xff]
      %v517 = vld [vmem:[%s283 + $0x180] sm:$0xff]
      %v518 = vld [vmem:[%s283 + $0x188] sm:$0xff]
      %v519 = vld [vmem:[%s283 + $0x190] sm:$0xff]
      %v520 = vld [vmem:[%s283 + $0x198] sm:$0xff]
      %v521 = vld [vmem:[%s283 + $0x1a0] sm:$0xff]
      %v522 = vld [vmem:[%s283 + $0x1a8] sm:$0xff]
      %v523 = vld [vmem:[%s283 + $0x1b0] sm:$0xff]
      %v524 = vld [vmem:[%s283 + $0x1b8] sm:$0xff]
      %v525 = vld [vmem:[%s283 + $0x1c0] sm:$0xff]
      %v526 = vld [vmem:[%s283 + $0x1c8] sm:$0xff]
      %v527 = vld [vmem:[%s283 + $0x1d0] sm:$0xff]
      %v528 = vld [vmem:[%s283 + $0x1d8] sm:$0xff]
      %v529 = vld [vmem:[%s283 + $0x1e0] sm:$0xff]
      %v530 = vld [vmem:[%s283 + $0x1e8] sm:$0xff]
      %v531 = vld [vmem:[%s283 + $0x1f0] sm:$0xff]
      %v532 = vld [vmem:[%s283 + $0x1f8] sm:$0xff]
      %v533 = vld [vmem:[%s283 + $0x200] sm:$0xff]
      %v534 = vld [vmem:[%s283 + $0x208] sm:$0xff]
      %v535 = vld [vmem:[%s283 + $0x210] sm:$0xff]
      %v536 = vld [vmem:[%s283 + $0x218] sm:$0xff]
      %v537 = vld [vmem:[%s283 + $0x220] sm:$0xff]
      %v538 = vld [vmem:[%s283 + $0x228] sm:$0xff]
      %v539 = vld [vmem:[%s283 + $0x230] sm:$0xff]
      %v540 = vld [vmem:[%s283 + $0x238] sm:$0xff]
      %v541 = vld [vmem:[%s283 + $0x240] sm:$0xff]
      %v542 = vld [vmem:[%s283 + $0x248] sm:$0xff]
      %v543 = vld [vmem:[%s283 + $0x250] sm:$0xff]
      %v544 = vld [vmem:[%s283 + $0x258] sm:$0xff]
      %v545 = vld [vmem:[%s283 + $0x260] sm:$0xff]
      %v546 = vld [vmem:[%s283 + $0x268] sm:$0xff]
      %v547 = vld [vmem:[%s283 + $0x270] sm:$0xff]
      %v548 = vld [vmem:[%s283 + $0x278] sm:$0xff]
      %v549 = vld [vmem:[%s283 + $0x280] sm:$0xff]
      %v550 = vld [vmem:[%s283 + $0x288] sm:$0xff]
      %v551 = vld [vmem:[%s283 + $0x290] sm:$0xff]
      %v552 = vld [vmem:[%s283 + $0x298] sm:$0xff]
      %v553 = vld [vmem:[%s283 + $0x2a0] sm:$0xff]
      %v554 = vld [vmem:[%s283 + $0x2a8] sm:$0xff]
      %v555 = vld [vmem:[%s283 + $0x2b0] sm:$0xff]
      %v556 = vld [vmem:[%s283 + $0x2b8] sm:$0xff]
      %v557 = vld [vmem:[%s283 + $0x2c0] sm:$0xff]
      %v558 = vld [vmem:[%s283 + $0x2c8] sm:$0xff]
      %v559 = vld [vmem:[%s283 + $0x2d0] sm:$0xff]
      %v560 = vld [vmem:[%s283 + $0x2d8] sm:$0xff]
      %v561 = vld [vmem:[%s283 + $0x2e0] sm:$0xff]
      %v562 = vld [vmem:[%s283 + $0x2e8] sm:$0xff]
      %v563 = vld [vmem:[%s283 + $0x2f0] sm:$0xff]
      %v564 = vld [vmem:[%s283 + $0x2f8] sm:$0xff]
      %v565 = vld [vmem:[%s283 + $0x300] sm:$0xff]
      %v566 = vld [vmem:[%s283 + $0x308] sm:$0xff]
      %v567 = vld [vmem:[%s283 + $0x310] sm:$0xff]
      %v568 = vld [vmem:[%s283 + $0x318] sm:$0xff]
      %v569 = vld [vmem:[%s283 + $0x320] sm:$0xff]
      %v570 = vld [vmem:[%s283 + $0x328] sm:$0xff]
      %v571 = vld [vmem:[%s283 + $0x330] sm:$0xff]
      %v572 = vld [vmem:[%s283 + $0x338] sm:$0xff]
      %v573 = vld [vmem:[%s283 + $0x340] sm:$0xff]
      %v574 = vld [vmem:[%s283 + $0x348] sm:$0xff]
      %v575 = vld [vmem:[%s283 + $0x350] sm:$0xff]
      %v576 = vld [vmem:[%s283 + $0x358] sm:$0xff]
      %v577 = vld [vmem:[%s283 + $0x360] sm:$0xff]
      %v578 = vld [vmem:[%s283 + $0x368] sm:$0xff]
      %v579 = vld [vmem:[%s283 + $0x370] sm:$0xff]
      %v580 = vld [vmem:[%s283 + $0x378] sm:$0xff]
      %v581 = vld [vmem:[%s283 + $0x380] sm:$0xff]
      %v582 = vld [vmem:[%s283 + $0x388] sm:$0xff]
      %v583 = vld [vmem:[%s283 + $0x390] sm:$0xff]
      %v584 = vld [vmem:[%s283 + $0x398] sm:$0xff]
      %v585 = vld [vmem:[%s283 + $0x3a0] sm:$0xff]
      %v586 = vld [vmem:[%s283 + $0x3a8] sm:$0xff]
      %v587 = vld [vmem:[%s283 + $0x3b0] sm:$0xff]
      %v588 = vld [vmem:[%s283 + $0x3b8] sm:$0xff]
      %v589 = vld [vmem:[%s283 + $0x3c0] sm:$0xff]
      %v590 = vld [vmem:[%s283 + $0x3c8] sm:$0xff]
      %v591 = vld [vmem:[%s283 + $0x3d0] sm:$0xff]
      %v592 = vld [vmem:[%s283 + $0x3d8] sm:$0xff]
      %v593 = vld [vmem:[%s283 + $0x3e0] sm:$0xff]
      %v594 = vld [vmem:[%s283 + $0x3e8] sm:$0xff]
      %v595 = vld [vmem:[%s283 + $0x3f0] sm:$0xff]
      %v596 = vld [vmem:[%s283 + $0x3f8] sm:$0xff]
      %v597 = vpack.c.bf16 %v470, %v469
      %v598 = vpack.c.bf16 %v472, %v471
      %v599 = vpack.c.bf16 %v474, %v473
      %v600 = vpack.c.bf16 %v476, %v475
      %v601 = vpack.c.bf16 %v478, %v477
      %v602 = vpack.c.bf16 %v480, %v479
      %v603 = vpack.c.bf16 %v482, %v481
      %v604 = vpack.c.bf16 %v484, %v483
      %v605 = vpack.c.bf16 %v486, %v485
      %v606 = vpack.c.bf16 %v488, %v487
      %v607 = vpack.c.bf16 %v490, %v489
      %v608 = vpack.c.bf16 %v492, %v491
      %v609 = vpack.c.bf16 %v494, %v493
      %v610 = vpack.c.bf16 %v496, %v495
      %v611 = vpack.c.bf16 %v498, %v497
      %v612 = vpack.c.bf16 %v500, %v499
      %v613 = vpack.c.bf16 %v502, %v501
      %v614 = vpack.c.bf16 %v504, %v503
      %v615 = vpack.c.bf16 %v506, %v505
      %v616 = vpack.c.bf16 %v508, %v507
      %v617 = vpack.c.bf16 %v510, %v509
      %v618 = vpack.c.bf16 %v512, %v511
      %v619 = vpack.c.bf16 %v514, %v513
      %v620 = vpack.c.bf16 %v516, %v515
      %v621 = vpack.c.bf16 %v518, %v517
      %v622 = vpack.c.bf16 %v520, %v519
      %v623 = vpack.c.bf16 %v522, %v521
      %v624 = vpack.c.bf16 %v524, %v523
      %v625 = vpack.c.bf16 %v526, %v525
      %v626 = vpack.c.bf16 %v528, %v527
      %v627 = vpack.c.bf16 %v530, %v529
      %v628 = vpack.c.bf16 %v532, %v531
      %v629 = vpack.c.bf16 %v534, %v533
      %v630 = vpack.c.bf16 %v536, %v535
      %v631 = vpack.c.bf16 %v538, %v537
      %v632 = vpack.c.bf16 %v540, %v539
      %v633 = vpack.c.bf16 %v542, %v541
      %v634 = vpack.c.bf16 %v544, %v543
      %v635 = vpack.c.bf16 %v546, %v545
      %v636 = vpack.c.bf16 %v548, %v547
      %v637 = vpack.c.bf16 %v550, %v549
      %v638 = vpack.c.bf16 %v552, %v551
      %v639 = vpack.c.bf16 %v554, %v553
      %v640 = vpack.c.bf16 %v556, %v555
      %v641 = vpack.c.bf16 %v558, %v557
      %v642 = vpack.c.bf16 %v560, %v559
      %v643 = vpack.c.bf16 %v562, %v561
      %v644 = vpack.c.bf16 %v564, %v563
      %v645 = vpack.c.bf16 %v566, %v565
      %v646 = vpack.c.bf16 %v568, %v567
      %v647 = vpack.c.bf16 %v570, %v569
      %v648 = vpack.c.bf16 %v572, %v571
      %v649 = vpack.c.bf16 %v574, %v573
      %v650 = vpack.c.bf16 %v576, %v575
      %v651 = vpack.c.bf16 %v578, %v577
      %v652 = vpack.c.bf16 %v580, %v579
      %v653 = vpack.c.bf16 %v582, %v581
      %v654 = vpack.c.bf16 %v584, %v583
      %v655 = vpack.c.bf16 %v586, %v585
      %v656 = vpack.c.bf16 %v588, %v587
      %v657 = vpack.c.bf16 %v590, %v589
      %v658 = vpack.c.bf16 %v592, %v591
      %v659 = vpack.c.bf16 %v594, %v593
      %v660 = vpack.c.bf16 %v596, %v595
      %662 = vset.pattern.permute.xlu0 0
      %663 = vperm.xlu0 %662, %v437
      %v664 = vpop.permute.xlu0 %663
      %667 = vset.pattern.permute.xlu0 0
      %668 = vperm.xlu0 %667, %v438
      %v669 = vpop.permute.xlu0 %668
      %672 = vset.pattern.permute.xlu0 0
      %673 = vperm.xlu0 %672, %v439
      %v674 = vpop.permute.xlu0 %673
      %677 = vset.pattern.permute.xlu0 0
      %678 = vperm.xlu0 %677, %v440
      %v679 = vpop.permute.xlu0 %678
      %682 = vset.pattern.permute.xlu0 0
      %683 = vperm.xlu0 %682, %v441
      %v684 = vpop.permute.xlu0 %683
      %687 = vset.pattern.permute.xlu0 0
      %688 = vperm.xlu0 %687, %v442
      %v689 = vpop.permute.xlu0 %688
      %692 = vset.pattern.permute.xlu0 0
      %693 = vperm.xlu0 %692, %v443
      %v694 = vpop.permute.xlu0 %693
      %697 = vset.pattern.permute.xlu0 0
      %698 = vperm.xlu0 %697, %v444
      %v699 = vpop.permute.xlu0 %698
      %702 = vset.pattern.permute.xlu0 0
      %703 = vperm.xlu0 %702, %v445
      %v704 = vpop.permute.xlu0 %703
      %707 = vset.pattern.permute.xlu0 0
      %708 = vperm.xlu0 %707, %v446
      %v709 = vpop.permute.xlu0 %708
      %712 = vset.pattern.permute.xlu0 0
      %713 = vperm.xlu0 %712, %v447
      %v714 = vpop.permute.xlu0 %713
      %717 = vset.pattern.permute.xlu0 0
      %718 = vperm.xlu0 %717, %v448
      %v719 = vpop.permute.xlu0 %718
      %722 = vset.pattern.permute.xlu0 0
      %723 = vperm.xlu0 %722, %v449
      %v724 = vpop.permute.xlu0 %723
      %727 = vset.pattern.permute.xlu0 0
      %728 = vperm.xlu0 %727, %v450
      %v729 = vpop.permute.xlu0 %728
      %732 = vset.pattern.permute.xlu0 0
      %733 = vperm.xlu0 %732, %v451
      %v734 = vpop.permute.xlu0 %733
      %737 = vset.pattern.permute.xlu0 0
      %738 = vperm.xlu0 %737, %v452
      %v739 = vpop.permute.xlu0 %738
      %742 = vset.pattern.permute.xlu0 0
      %743 = vperm.xlu0 %742, %v453
      %v744 = vpop.permute.xlu0 %743
      %747 = vset.pattern.permute.xlu0 0
      %748 = vperm.xlu0 %747, %v454
      %v749 = vpop.permute.xlu0 %748
      %752 = vset.pattern.permute.xlu0 0
      %753 = vperm.xlu0 %752, %v455
      %v754 = vpop.permute.xlu0 %753
      %757 = vset.pattern.permute.xlu0 0
      %758 = vperm.xlu0 %757, %v456
      %v759 = vpop.permute.xlu0 %758
      %762 = vset.pattern.permute.xlu0 0
      %763 = vperm.xlu0 %762, %v457
      %v764 = vpop.permute.xlu0 %763
      %767 = vset.pattern.permute.xlu0 0
      %768 = vperm.xlu0 %767, %v458
      %v769 = vpop.permute.xlu0 %768
      %772 = vset.pattern.permute.xlu0 0
      %773 = vperm.xlu0 %772, %v459
      %v774 = vpop.permute.xlu0 %773
      %777 = vset.pattern.permute.xlu0 0
      %778 = vperm.xlu0 %777, %v460
      %v779 = vpop.permute.xlu0 %778
      %782 = vset.pattern.permute.xlu0 0
      %783 = vperm.xlu0 %782, %v461
      %v784 = vpop.permute.xlu0 %783
      %787 = vset.pattern.permute.xlu0 0
      %788 = vperm.xlu0 %787, %v462
      %v789 = vpop.permute.xlu0 %788
      %792 = vset.pattern.permute.xlu0 0
      %793 = vperm.xlu0 %792, %v463
      %v794 = vpop.permute.xlu0 %793
      %797 = vset.pattern.permute.xlu0 0
      %798 = vperm.xlu0 %797, %v464
      %v799 = vpop.permute.xlu0 %798
      %802 = vset.pattern.permute.xlu0 0
      %803 = vperm.xlu0 %802, %v465
      %v804 = vpop.permute.xlu0 %803
      %807 = vset.pattern.permute.xlu0 0
      %808 = vperm.xlu0 %807, %v466
      %v809 = vpop.permute.xlu0 %808
      %812 = vset.pattern.permute.xlu0 0
      %813 = vperm.xlu0 %812, %v467
      %v814 = vpop.permute.xlu0 %813
      %817 = vset.pattern.permute.xlu0 0
      %818 = vperm.xlu0 %817, %v468
      %v819 = vpop.permute.xlu0 %818
      %v949 = vunpack.c.l.b16 %v309
      %v950 = vunpack.c.h.b16 %v309
      %v951 = vunpack.c.l.b16 %v310
      %v952 = vunpack.c.h.b16 %v310
      %v953 = vunpack.c.l.b16 %v311
      %v954 = vunpack.c.h.b16 %v311
      %v955 = vunpack.c.l.b16 %v312
      %v956 = vunpack.c.h.b16 %v312
      %v957 = vunpack.c.l.b16 %v313
      %v958 = vunpack.c.h.b16 %v313
      %v959 = vunpack.c.l.b16 %v314
      %v960 = vunpack.c.h.b16 %v314
      %v961 = vunpack.c.l.b16 %v315
      %v962 = vunpack.c.h.b16 %v315
      %v963 = vunpack.c.l.b16 %v316
      %v964 = vunpack.c.h.b16 %v316
      %v965 = vunpack.c.l.b16 %v317
      %v966 = vunpack.c.h.b16 %v317
      %v967 = vunpack.c.l.b16 %v318
      %v968 = vunpack.c.h.b16 %v318
      %v969 = vunpack.c.l.b16 %v319
      %v970 = vunpack.c.h.b16 %v319
      %v971 = vunpack.c.l.b16 %v320
      %v972 = vunpack.c.h.b16 %v320
      %v973 = vunpack.c.l.b16 %v321
      %v974 = vunpack.c.h.b16 %v321
      %v975 = vunpack.c.l.b16 %v322
      %v976 = vunpack.c.h.b16 %v322
      %v977 = vunpack.c.l.b16 %v323
      %v978 = vunpack.c.h.b16 %v323
      %v979 = vunpack.c.l.b16 %v324
      %v980 = vunpack.c.h.b16 %v324
      %v981 = vunpack.c.l.b16 %v325
      %v982 = vunpack.c.h.b16 %v325
      %v983 = vunpack.c.l.b16 %v326
      %v984 = vunpack.c.h.b16 %v326
      %v985 = vunpack.c.l.b16 %v327
      %v986 = vunpack.c.h.b16 %v327
      %v987 = vunpack.c.l.b16 %v328
      %v988 = vunpack.c.h.b16 %v328
      %v989 = vunpack.c.l.b16 %v329
      %v990 = vunpack.c.h.b16 %v329
      %v991 = vunpack.c.l.b16 %v330
      %v992 = vunpack.c.h.b16 %v330
      %v993 = vunpack.c.l.b16 %v331
      %v994 = vunpack.c.h.b16 %v331
      %v995 = vunpack.c.l.b16 %v332
      %v996 = vunpack.c.h.b16 %v332
      %v997 = vunpack.c.l.b16 %v333
      %v998 = vunpack.c.h.b16 %v333
      %v999 = vunpack.c.l.b16 %v334
      %v1000 = vunpack.c.h.b16 %v334
      %v1001 = vunpack.c.l.b16 %v335
      %v1002 = vunpack.c.h.b16 %v335
      %v1003 = vunpack.c.l.b16 %v336
      %v1004 = vunpack.c.h.b16 %v336
      %v1005 = vunpack.c.l.b16 %v337
      %v1006 = vunpack.c.h.b16 %v337
      %v1007 = vunpack.c.l.b16 %v338
      %v1008 = vunpack.c.h.b16 %v338
      %v1009 = vunpack.c.l.b16 %v339
      %v1010 = vunpack.c.h.b16 %v339
      %v1011 = vunpack.c.l.b16 %v340
      %v1012 = vunpack.c.h.b16 %v340
      %v1013 = vunpack.c.l.b16 %v341
      %v1014 = vunpack.c.h.b16 %v341
      %v1015 = vunpack.c.l.b16 %v342
      %v1016 = vunpack.c.h.b16 %v342
      %v1017 = vunpack.c.l.b16 %v343
      %v1018 = vunpack.c.h.b16 %v343
      %v1019 = vunpack.c.l.b16 %v344
      %v1020 = vunpack.c.h.b16 %v344
      %v1021 = vunpack.c.l.b16 %v345
      %v1022 = vunpack.c.h.b16 %v345
      %v1023 = vunpack.c.l.b16 %v346
      %v1024 = vunpack.c.h.b16 %v346
      %v1025 = vunpack.c.l.b16 %v347
      %v1026 = vunpack.c.h.b16 %v347
      %v1027 = vunpack.c.l.b16 %v348
      %v1028 = vunpack.c.h.b16 %v348
      %v1029 = vunpack.c.l.b16 %v349
      %v1030 = vunpack.c.h.b16 %v349
      %v1031 = vunpack.c.l.b16 %v350
      %v1032 = vunpack.c.h.b16 %v350
      %v1033 = vunpack.c.l.b16 %v351
      %v1034 = vunpack.c.h.b16 %v351
      %v1035 = vunpack.c.l.b16 %v352
      %v1036 = vunpack.c.h.b16 %v352
      %v1037 = vunpack.c.l.b16 %v353
      %v1038 = vunpack.c.h.b16 %v353
      %v1039 = vunpack.c.l.b16 %v354
      %v1040 = vunpack.c.h.b16 %v354
      %v1041 = vunpack.c.l.b16 %v355
      %v1042 = vunpack.c.h.b16 %v355
      %v1043 = vunpack.c.l.b16 %v356
      %v1044 = vunpack.c.h.b16 %v356
      %v1045 = vunpack.c.l.b16 %v357
      %v1046 = vunpack.c.h.b16 %v357
      %v1047 = vunpack.c.l.b16 %v358
      %v1048 = vunpack.c.h.b16 %v358
      %v1049 = vunpack.c.l.b16 %v359
      %v1050 = vunpack.c.h.b16 %v359
      %v1051 = vunpack.c.l.b16 %v360
      %v1052 = vunpack.c.h.b16 %v360
      %v1053 = vunpack.c.l.b16 %v361
      %v1054 = vunpack.c.h.b16 %v361
      %v1055 = vunpack.c.l.b16 %v362
      %v1056 = vunpack.c.h.b16 %v362
      %v1057 = vunpack.c.l.b16 %v363
      %v1058 = vunpack.c.h.b16 %v363
      %v1059 = vunpack.c.l.b16 %v364
      %v1060 = vunpack.c.h.b16 %v364
      %v1061 = vunpack.c.l.b16 %v365
      %v1062 = vunpack.c.h.b16 %v365
      %v1063 = vunpack.c.l.b16 %v366
      %v1064 = vunpack.c.h.b16 %v366
      %v1065 = vunpack.c.l.b16 %v367
      %v1066 = vunpack.c.h.b16 %v367
      %v1067 = vunpack.c.l.b16 %v368
      %v1068 = vunpack.c.h.b16 %v368
      %v1069 = vunpack.c.l.b16 %v369
      %v1070 = vunpack.c.h.b16 %v369
      %v1071 = vunpack.c.l.b16 %v370
      %v1072 = vunpack.c.h.b16 %v370
      %v1073 = vunpack.c.l.b16 %v371
      %v1074 = vunpack.c.h.b16 %v371
      %v1075 = vunpack.c.l.b16 %v372
      %v1076 = vunpack.c.h.b16 %v372
      %v1077 = vunpack.c.l.b16 %v373
      %v1078 = vunpack.c.h.b16 %v373
      %v1079 = vunpack.c.l.b16 %v374
      %v1080 = vunpack.c.h.b16 %v374
      %v1081 = vunpack.c.l.b16 %v375
      %v1082 = vunpack.c.h.b16 %v375
      %v1083 = vunpack.c.l.b16 %v376
      %v1084 = vunpack.c.h.b16 %v376
      %v1085 = vunpack.c.l.b16 %v377
      %v1086 = vunpack.c.h.b16 %v377
      %v1087 = vunpack.c.l.b16 %v378
      %v1088 = vunpack.c.h.b16 %v378
      %v1089 = vunpack.c.l.b16 %v379
      %v1090 = vunpack.c.h.b16 %v379
      %v1091 = vunpack.c.l.b16 %v380
      %v1092 = vunpack.c.h.b16 %v380
      %v1093 = vunpack.c.l.b16 %v381
      %v1094 = vunpack.c.h.b16 %v381
      %v1095 = vunpack.c.l.b16 %v382
      %v1096 = vunpack.c.h.b16 %v382
      %v1097 = vunpack.c.l.b16 %v383
      %v1098 = vunpack.c.h.b16 %v383
      %v1099 = vunpack.c.l.b16 %v384
      %v1100 = vunpack.c.h.b16 %v384
      %v1101 = vunpack.c.l.b16 %v385
      %v1102 = vunpack.c.h.b16 %v385
      %v1103 = vunpack.c.l.b16 %v386
      %v1104 = vunpack.c.h.b16 %v386
      %v1105 = vunpack.c.l.b16 %v387
      %v1106 = vunpack.c.h.b16 %v387
      %v1107 = vunpack.c.l.b16 %v388
      %v1108 = vunpack.c.h.b16 %v388
      %v1109 = vunpack.c.l.b16 %v389
      %v1110 = vunpack.c.h.b16 %v389
      %v1111 = vunpack.c.l.b16 %v390
      %v1112 = vunpack.c.h.b16 %v390
      %v1113 = vunpack.c.l.b16 %v391
      %v1114 = vunpack.c.h.b16 %v391
      %v1115 = vunpack.c.l.b16 %v392
      %v1116 = vunpack.c.h.b16 %v392
      %v1117 = vunpack.c.l.b16 %v393
      %v1118 = vunpack.c.h.b16 %v393
      %v1119 = vunpack.c.l.b16 %v394
      %v1120 = vunpack.c.h.b16 %v394
      %v1121 = vunpack.c.l.b16 %v395
      %v1122 = vunpack.c.h.b16 %v395
      %v1123 = vunpack.c.l.b16 %v396
      %v1124 = vunpack.c.h.b16 %v396
      %v1125 = vunpack.c.l.b16 %v397
      %v1126 = vunpack.c.h.b16 %v397
      %v1127 = vunpack.c.l.b16 %v398
      %v1128 = vunpack.c.h.b16 %v398
      %v1129 = vunpack.c.l.b16 %v399
      %v1130 = vunpack.c.h.b16 %v399
      %v1131 = vunpack.c.l.b16 %v400
      %v1132 = vunpack.c.h.b16 %v400
      %v1133 = vunpack.c.l.b16 %v401
      %v1134 = vunpack.c.h.b16 %v401
      %v1135 = vunpack.c.l.b16 %v402
      %v1136 = vunpack.c.h.b16 %v402
      %v1137 = vunpack.c.l.b16 %v403
      %v1138 = vunpack.c.h.b16 %v403
      %v1139 = vunpack.c.l.b16 %v404
      %v1140 = vunpack.c.h.b16 %v404
      %v1141 = vunpack.c.l.b16 %v405
      %v1142 = vunpack.c.h.b16 %v405
      %v1143 = vunpack.c.l.b16 %v406
      %v1144 = vunpack.c.h.b16 %v406
      %v1145 = vunpack.c.l.b16 %v407
      %v1146 = vunpack.c.h.b16 %v407
      %v1147 = vunpack.c.l.b16 %v408
      %v1148 = vunpack.c.h.b16 %v408
      %v1149 = vunpack.c.l.b16 %v409
      %v1150 = vunpack.c.h.b16 %v409
      %v1151 = vunpack.c.l.b16 %v410
      %v1152 = vunpack.c.h.b16 %v410
      %v1153 = vunpack.c.l.b16 %v411
      %v1154 = vunpack.c.h.b16 %v411
      %v1155 = vunpack.c.l.b16 %v412
      %v1156 = vunpack.c.h.b16 %v412
      %v1157 = vunpack.c.l.b16 %v413
      %v1158 = vunpack.c.h.b16 %v413
      %v1159 = vunpack.c.l.b16 %v414
      %v1160 = vunpack.c.h.b16 %v414
      %v1161 = vunpack.c.l.b16 %v415
      %v1162 = vunpack.c.h.b16 %v415
      %v1163 = vunpack.c.l.b16 %v416
      %v1164 = vunpack.c.h.b16 %v416
      %v1165 = vunpack.c.l.b16 %v417
      %v1166 = vunpack.c.h.b16 %v417
      %v1167 = vunpack.c.l.b16 %v418
      %v1168 = vunpack.c.h.b16 %v418
      %v1169 = vunpack.c.l.b16 %v419
      %v1170 = vunpack.c.h.b16 %v419
      %v1171 = vunpack.c.l.b16 %v420
      %v1172 = vunpack.c.h.b16 %v420
      %v1173 = vunpack.c.l.b16 %v421
      %v1174 = vunpack.c.h.b16 %v421
      %v1175 = vunpack.c.l.b16 %v422
      %v1176 = vunpack.c.h.b16 %v422
      %v1177 = vunpack.c.l.b16 %v423
      %v1178 = vunpack.c.h.b16 %v423
      %v1179 = vunpack.c.l.b16 %v424
      %v1180 = vunpack.c.h.b16 %v424
      %v1181 = vunpack.c.l.b16 %v425
      %v1182 = vunpack.c.h.b16 %v425
      %v1183 = vunpack.c.l.b16 %v426
      %v1184 = vunpack.c.h.b16 %v426
      %v1185 = vunpack.c.l.b16 %v427
      %v1186 = vunpack.c.h.b16 %v427
      %v1187 = vunpack.c.l.b16 %v428
      %v1188 = vunpack.c.h.b16 %v428
      %v1189 = vunpack.c.l.b16 %v429
      %v1190 = vunpack.c.h.b16 %v429
      %v1191 = vunpack.c.l.b16 %v430
      %v1192 = vunpack.c.h.b16 %v430
      %v1193 = vunpack.c.l.b16 %v431
      %v1194 = vunpack.c.h.b16 %v431
      %v1195 = vunpack.c.l.b16 %v432
      %v1196 = vunpack.c.h.b16 %v432
      %v1197 = vunpack.c.l.b16 %v433
      %v1198 = vunpack.c.h.b16 %v433
      %v1199 = vunpack.c.l.b16 %v434
      %v1200 = vunpack.c.h.b16 %v434
      %v1201 = vunpack.c.l.b16 %v435
      %v1202 = vunpack.c.h.b16 %v435
      %v1203 = vunpack.c.l.b16 %v436
      %v1204 = vunpack.c.h.b16 %v436
      %v1205 = vpack.c.b16 %v957, %v949
      %v1206 = vpack.c.b16 %v958, %v950
      %v1207 = vpack.c.b16 %v959, %v951
      %v1208 = vpack.c.b16 %v960, %v952
      %v1209 = vpack.c.b16 %v961, %v953
      %v1210 = vpack.c.b16 %v962, %v954
      %v1211 = vpack.c.b16 %v963, %v955
      %v1212 = vpack.c.b16 %v964, %v956
      %v1213 = vpack.c.b16 %v973, %v965
      %v1214 = vpack.c.b16 %v974, %v966
      %v1215 = vpack.c.b16 %v975, %v967
      %v1216 = vpack.c.b16 %v976, %v968
      %v1217 = vpack.c.b16 %v977, %v969
      %v1218 = vpack.c.b16 %v978, %v970
      %v1219 = vpack.c.b16 %v979, %v971
      %v1220 = vpack.c.b16 %v980, %v972
      %v1221 = vpack.c.b16 %v989, %v981
      %v1222 = vpack.c.b16 %v990, %v982
      %v1223 = vpack.c.b16 %v991, %v983
      %v1224 = vpack.c.b16 %v992, %v984
      %v1225 = vpack.c.b16 %v993, %v985
      %v1226 = vpack.c.b16 %v994, %v986
      %v1227 = vpack.c.b16 %v995, %v987
      %v1228 = vpack.c.b16 %v996, %v988
      %v1229 = vpack.c.b16 %v1005, %v997
      %v1230 = vpack.c.b16 %v1006, %v998
      %v1231 = vpack.c.b16 %v1007, %v999
      %v1232 = vpack.c.b16 %v1008, %v1000
      %v1233 = vpack.c.b16 %v1009, %v1001
      %v1234 = vpack.c.b16 %v1010, %v1002
      %v1235 = vpack.c.b16 %v1011, %v1003
      %v1236 = vpack.c.b16 %v1012, %v1004
      %v1237 = vpack.c.b16 %v1021, %v1013
      %v1238 = vpack.c.b16 %v1022, %v1014
      %v1239 = vpack.c.b16 %v1023, %v1015
      %v1240 = vpack.c.b16 %v1024, %v1016
      %v1241 = vpack.c.b16 %v1025, %v1017
      %v1242 = vpack.c.b16 %v1026, %v1018
      %v1243 = vpack.c.b16 %v1027, %v1019
      %v1244 = vpack.c.b16 %v1028, %v1020
      %v1245 = vpack.c.b16 %v1037, %v1029
      %v1246 = vpack.c.b16 %v1038, %v1030
      %v1247 = vpack.c.b16 %v1039, %v1031
      %v1248 = vpack.c.b16 %v1040, %v1032
      %v1249 = vpack.c.b16 %v1041, %v1033
      %v1250 = vpack.c.b16 %v1042, %v1034
      %v1251 = vpack.c.b16 %v1043, %v1035
      %v1252 = vpack.c.b16 %v1044, %v1036
      %v1253 = vpack.c.b16 %v1053, %v1045
      %v1254 = vpack.c.b16 %v1054, %v1046
      %v1255 = vpack.c.b16 %v1055, %v1047
      %v1256 = vpack.c.b16 %v1056, %v1048
      %v1257 = vpack.c.b16 %v1057, %v1049
      %v1258 = vpack.c.b16 %v1058, %v1050
      %v1259 = vpack.c.b16 %v1059, %v1051
      %v1260 = vpack.c.b16 %v1060, %v1052
      %v1261 = vpack.c.b16 %v1069, %v1061
      %v1262 = vpack.c.b16 %v1070, %v1062
      %v1263 = vpack.c.b16 %v1071, %v1063
      %v1264 = vpack.c.b16 %v1072, %v1064
      %v1265 = vpack.c.b16 %v1073, %v1065
      %v1266 = vpack.c.b16 %v1074, %v1066
      %v1267 = vpack.c.b16 %v1075, %v1067
      %v1268 = vpack.c.b16 %v1076, %v1068
      %v1269 = vpack.c.b16 %v1085, %v1077
      %v1270 = vpack.c.b16 %v1086, %v1078
      %v1271 = vpack.c.b16 %v1087, %v1079
      %v1272 = vpack.c.b16 %v1088, %v1080
      %v1273 = vpack.c.b16 %v1089, %v1081
      %v1274 = vpack.c.b16 %v1090, %v1082
      %v1275 = vpack.c.b16 %v1091, %v1083
      %v1276 = vpack.c.b16 %v1092, %v1084
      %v1277 = vpack.c.b16 %v1101, %v1093
      %v1278 = vpack.c.b16 %v1102, %v1094
      %v1279 = vpack.c.b16 %v1103, %v1095
      %v1280 = vpack.c.b16 %v1104, %v1096
      %v1281 = vpack.c.b16 %v1105, %v1097
      %v1282 = vpack.c.b16 %v1106, %v1098
      %v1283 = vpack.c.b16 %v1107, %v1099
      %v1284 = vpack.c.b16 %v1108, %v1100
      %v1285 = vpack.c.b16 %v1117, %v1109
      %v1286 = vpack.c.b16 %v1118, %v1110
      %v1287 = vpack.c.b16 %v1119, %v1111
      %v1288 = vpack.c.b16 %v1120, %v1112
      %v1289 = vpack.c.b16 %v1121, %v1113
      %v1290 = vpack.c.b16 %v1122, %v1114
      %v1291 = vpack.c.b16 %v1123, %v1115
      %v1292 = vpack.c.b16 %v1124, %v1116
      %v1293 = vpack.c.b16 %v1133, %v1125
      %v1294 = vpack.c.b16 %v1134, %v1126
      %v1295 = vpack.c.b16 %v1135, %v1127
      %v1296 = vpack.c.b16 %v1136, %v1128
      %v1297 = vpack.c.b16 %v1137, %v1129
      %v1298 = vpack.c.b16 %v1138, %v1130
      %v1299 = vpack.c.b16 %v1139, %v1131
      %v1300 = vpack.c.b16 %v1140, %v1132
      %v1301 = vpack.c.b16 %v1149, %v1141
      %v1302 = vpack.c.b16 %v1150, %v1142
      %v1303 = vpack.c.b16 %v1151, %v1143
      %v1304 = vpack.c.b16 %v1152, %v1144
      %v1305 = vpack.c.b16 %v1153, %v1145
      %v1306 = vpack.c.b16 %v1154, %v1146
      %v1307 = vpack.c.b16 %v1155, %v1147
      %v1308 = vpack.c.b16 %v1156, %v1148
      %v1309 = vpack.c.b16 %v1165, %v1157
      %v1310 = vpack.c.b16 %v1166, %v1158
      %v1311 = vpack.c.b16 %v1167, %v1159
      %v1312 = vpack.c.b16 %v1168, %v1160
      %v1313 = vpack.c.b16 %v1169, %v1161
      %v1314 = vpack.c.b16 %v1170, %v1162
      %v1315 = vpack.c.b16 %v1171, %v1163
      %v1316 = vpack.c.b16 %v1172, %v1164
      %v1317 = vpack.c.b16 %v1181, %v1173
      %v1318 = vpack.c.b16 %v1182, %v1174
      %v1319 = vpack.c.b16 %v1183, %v1175
      %v1320 = vpack.c.b16 %v1184, %v1176
      %v1321 = vpack.c.b16 %v1185, %v1177
      %v1322 = vpack.c.b16 %v1186, %v1178
      %v1323 = vpack.c.b16 %v1187, %v1179
      %v1324 = vpack.c.b16 %v1188, %v1180
      %v1325 = vpack.c.b16 %v1197, %v1189
      %v1326 = vpack.c.b16 %v1198, %v1190
      %v1327 = vpack.c.b16 %v1199, %v1191
      %v1328 = vpack.c.b16 %v1200, %v1192
      %v1329 = vpack.c.b16 %v1201, %v1193
      %v1330 = vpack.c.b16 %v1202, %v1194
      %v1331 = vpack.c.b16 %v1203, %v1195
      %v1332 = vpack.c.b16 %v1204, %v1196
      %1461 = vmatprep.subr.bf16.mxu0 0
      %1462 = vmatpush1.bf16.msra.mxu0 %v597
      %1463 = vmatprep.subr.bf16.mxu0 0
      %1464 = vmatpush1.bf16.msra.mxu0 %v598
      %1465 = vmatprep.subr.bf16.mxu0 0
      %1466 = vmatpush1.bf16.msra.mxu0 %v599
      %1467 = vmatprep.subr.bf16.mxu0 0
      %1468 = vmatpush1.bf16.msra.mxu0 %v600
      %1469 = vmatprep.subr.bf16.mxu0 0
      %1470 = vmatpush1.bf16.msra.mxu0 %v601
      %1471 = vmatprep.subr.bf16.mxu0 0
      %1472 = vmatpush1.bf16.msra.mxu0 %v602
      %1473 = vmatprep.subr.bf16.mxu0 0
      %1474 = vmatpush1.bf16.msra.mxu0 %v603
      %1475 = vmatprep.subr.bf16.mxu0 0
      %1476 = vmatpush1.bf16.msra.mxu0 %v604
      %1477 = vmatprep.subr.bf16.mxu0 0
      %1478 = vmatpush1.bf16.msra.mxu0 %v605
      %1479 = vmatprep.subr.bf16.mxu0 0
      %1480 = vmatpush1.bf16.msra.mxu0 %v606
      %1481 = vmatprep.subr.bf16.mxu0 0
      %1482 = vmatpush1.bf16.msra.mxu0 %v607
      %1483 = vmatprep.subr.bf16.mxu0 0
      %1484 = vmatpush1.bf16.msra.mxu0 %v608
      %1485 = vmatprep.subr.bf16.mxu0 0
      %1486 = vmatpush1.bf16.msra.mxu0 %v609
      %1487 = vmatprep.subr.bf16.mxu0 0
      %1488 = vmatpush1.bf16.msra.mxu0 %v610
      %1489 = vmatprep.subr.bf16.mxu0 0
      %1490 = vmatpush1.bf16.msra.mxu0 %v611
      %1491 = vmatprep.subr.bf16.mxu0 0
      %1492 = vmatpush1.bf16.msra.mxu0 %v612
      %1493 = vmatprep.mubr.bf16.mxu0 %v1206
      %1494 = vmatmul.mubr.bf16.gmra.mrb[0].mxu0 %v1205
      %v1495 = vpop.f32.mrb[0].mxu0
      %v1496 = vadd.f32 %v664, %v1495
      %v1497 = vpop.f32.mrb[0].mxu0
      %v1498 = vpop.f32.mrb[0].mxu0
      %v1499 = vadd.f32 %v669, %v1498
      %v1500 = vpop.f32.mrb[0].mxu0
      %1501 = vmatprep.mubr.bf16.mxu0 %v1214
      %1502 = vmatmul.mubr.bf16.gmra.mrb[0].mxu0 %v1213
      %v1503 = vpop.f32.mrb[0].mxu0
      %v1504 = vadd.f32 %v674, %v1503
      %v1505 = vpop.f32.mrb[0].mxu0
      %v1506 = vpop.f32.mrb[0].mxu0
      %v1507 = vadd.f32 %v679, %v1506
      %v1508 = vpop.f32.mrb[0].mxu0
      %1509 = vmatprep.mubr.bf16.mxu0 %v1222
      %1510 = vmatmul.mubr.bf16.gmra.mrb[0].mxu0 %v1221
      %v1511 = vpop.f32.mrb[0].mxu0
      %v1512 = vadd.f32 %v684, %v1511
      %v1513 = vpop.f32.mrb[0].mxu0
      %v1514 = vpop.f32.mrb[0].mxu0
      %v1515 = vadd.f32 %v689, %v1514
      %v1516 = vpop.f32.mrb[0].mxu0
      %1517 = vmatprep.mubr.bf16.mxu0 %v1230
      %1518 = vmatmul.mubr.bf16.gmra.mrb[0].mxu0 %v1229
      %v1519 = vpop.f32.mrb[0].mxu0
      %v1520 = vadd.f32 %v694, %v1519
      %v1521 = vpop.f32.mrb[0].mxu0
      %v1522 = vpop.f32.mrb[0].mxu0
      %v1523 = vadd.f32 %v699, %v1522
      %v1524 = vpop.f32.mrb[0].mxu0
      %1525 = vmatprep.mubr.bf16.mxu0 %v1238
      %1526 = vmatmul.mubr.bf16.gmra.mrb[0].mxu0 %v1237
      %v1527 = vpop.f32.mrb[0].mxu0
      %v1528 = vadd.f32 %v704, %v1527
      %v1529 = vpop.f32.mrb[0].mxu0
      %v1530 = vpop.f32.mrb[0].mxu0
      %v1531 = vadd.f32 %v709, %v1530
      %v1532 = vpop.f32.mrb[0].mxu0
      %1533 = vmatprep.mubr.bf16.mxu0 %v1246
      %1534 = vmatmul.mubr.bf16.gmra.mrb[0].mxu0 %v1245
      %v1535 = vpop.f32.mrb[0].mxu0
      %v1536 = vadd.f32 %v714, %v1535
      %v1537 = vpop.f32.mrb[0].mxu0
      %v1538 = vpop.f32.mrb[0].mxu0
      %v1539 = vadd.f32 %v719, %v1538
      %v1540 = vpop.f32.mrb[0].mxu0
      %1541 = vmatprep.mubr.bf16.mxu0 %v1254
      %1542 = vmatmul.mubr.bf16.gmra.mrb[0].mxu0 %v1253
      %v1543 = vpop.f32.mrb[0].mxu0
      %v1544 = vadd.f32 %v724, %v1543
      %v1545 = vpop.f32.mrb[0].mxu0
      %v1546 = vpop.f32.mrb[0].mxu0
      %v1547 = vadd.f32 %v729, %v1546
      %v1548 = vpop.f32.mrb[0].mxu0
      %1549 = vmatprep.mubr.bf16.mxu0 %v1262
      %1550 = vmatmul.mubr.bf16.gmra.mrb[0].mxu0 %v1261
      %v1551 = vpop.f32.mrb[0].mxu0
      %v1552 = vadd.f32 %v734, %v1551
      %v1553 = vpop.f32.mrb[0].mxu0
      %v1554 = vpop.f32.mrb[0].mxu0
      %v1555 = vadd.f32 %v739, %v1554
      %v1556 = vpop.f32.mrb[0].mxu0
      %1557 = vmatprep.mubr.bf16.mxu0 %v1270
      %1558 = vmatmul.mubr.bf16.gmra.mrb[0].mxu0 %v1269
      %v1559 = vpop.f32.mrb[0].mxu0
      %v1560 = vadd.f32 %v744, %v1559
      %v1561 = vpop.f32.mrb[0].mxu0
      %v1562 = vpop.f32.mrb[0].mxu0
      %v1563 = vadd.f32 %v749, %v1562
      %v1564 = vpop.f32.mrb[0].mxu0
      %1565 = vmatprep.mubr.bf16.mxu0 %v1278
      %1566 = vmatmul.mubr.bf16.gmra.mrb[0].mxu0 %v1277
      %v1567 = vpop.f32.mrb[0].mxu0
      %v1568 = vadd.f32 %v754, %v1567
      %v1569 = vpop.f32.mrb[0].mxu0
      %v1570 = vpop.f32.mrb[0].mxu0
      %v1571 = vadd.f32 %v759, %v1570
      %v1572 = vpop.f32.mrb[0].mxu0
      %1573 = vmatprep.mubr.bf16.mxu0 %v1286
      %1574 = vmatmul.mubr.bf16.gmra.mrb[0].mxu0 %v1285
      %v1575 = vpop.f32.mrb[0].mxu0
      %v1576 = vadd.f32 %v764, %v1575
      %v1577 = vpop.f32.mrb[0].mxu0
      %v1578 = vpop.f32.mrb[0].mxu0
      %v1579 = vadd.f32 %v769, %v1578
      %v1580 = vpop.f32.mrb[0].mxu0
      %1581 = vmatprep.mubr.bf16.mxu0 %v1294
      %1582 = vmatmul.mubr.bf16.gmra.mrb[0].mxu0 %v1293
      %v1583 = vpop.f32.mrb[0].mxu0
      %v1584 = vadd.f32 %v774, %v1583
      %v1585 = vpop.f32.mrb[0].mxu0
      %v1586 = vpop.f32.mrb[0].mxu0
      %v1587 = vadd.f32 %v779, %v1586
      %v1588 = vpop.f32.mrb[0].mxu0
      %1589 = vmatprep.mubr.bf16.mxu0 %v1302
      %1590 = vmatmul.mubr.bf16.gmra.mrb[0].mxu0 %v1301
      %v1591 = vpop.f32.mrb[0].mxu0
      %v1592 = vadd.f32 %v784, %v1591
      %v1593 = vpop.f32.mrb[0].mxu0
      %v1594 = vpop.f32.mrb[0].mxu0
      %v1595 = vadd.f32 %v789, %v1594
      %v1596 = vpop.f32.mrb[0].mxu0
      %1597 = vmatprep.mubr.bf16.mxu0 %v1310
      %1598 = vmatmul.mubr.bf16.gmra.mrb[0].mxu0 %v1309
      %v1599 = vpop.f32.mrb[0].mxu0
      %v1600 = vadd.f32 %v794, %v1599
      %v1601 = vpop.f32.mrb[0].mxu0
      %v1602 = vpop.f32.mrb[0].mxu0
      %v1603 = vadd.f32 %v799, %v1602
      %v1604 = vpop.f32.mrb[0].mxu0
      %1605 = vmatprep.mubr.bf16.mxu0 %v1318
      %1606 = vmatmul.mubr.bf16.gmra.mrb[0].mxu0 %v1317
      %v1607 = vpop.f32.mrb[0].mxu0
      %v1608 = vadd.f32 %v804, %v1607
      %v1609 = vpop.f32.mrb[0].mxu0
      %v1610 = vpop.f32.mrb[0].mxu0
      %v1611 = vadd.f32 %v809, %v1610
      %v1612 = vpop.f32.mrb[0].mxu0
      %1613 = vmatprep.mubr.bf16.mxu0 %v1326
      %1614 = vmatmul.mubr.bf16.gmra.mrb[0].mxu0 %v1325
      %v1615 = vpop.f32.mrb[0].mxu0
      %v1616 = vadd.f32 %v814, %v1615
      %v1617 = vpop.f32.mrb[0].mxu0
      %v1618 = vpop.f32.mrb[0].mxu0
      %v1619 = vadd.f32 %v819, %v1618
      %v1620 = vpop.f32.mrb[0].mxu0
      %1621 = vdwg.mxu0
      %1622 = vmatprep.subr.bf16.mxu0 0
      %1623 = vmatpush1.bf16.msra.mxu0 %v613
      %1624 = vmatprep.subr.bf16.mxu0 0
      %1625 = vmatpush1.bf16.msra.mxu0 %v614
      %1626 = vmatprep.subr.bf16.mxu0 0
      %1627 = vmatpush1.bf16.msra.mxu0 %v615
      %1628 = vmatprep.subr.bf16.mxu0 0
      %1629 = vmatpush1.bf16.msra.mxu0 %v616
      %1630 = vmatprep.subr.bf16.mxu0 0
      %1631 = vmatpush1.bf16.msra.mxu0 %v617
      %1632 = vmatprep.subr.bf16.mxu0 0
      %1633 = vmatpush1.bf16.msra.mxu0 %v618
      %1634 = vmatprep.subr.bf16.mxu0 0
      %1635 = vmatpush1.bf16.msra.mxu0 %v619
      %1636 = vmatprep.subr.bf16.mxu0 0
      %1637 = vmatpush1.bf16.msra.mxu0 %v620
      %1638 = vmatprep.subr.bf16.mxu0 0
      %1639 = vmatpush1.bf16.msra.mxu0 %v621
      %1640 = vmatprep.subr.bf16.mxu0 0
      %1641 = vmatpush1.bf16.msra.mxu0 %v622
      %1642 = vmatprep.subr.bf16.mxu0 0
      %1643 = vmatpush1.bf16.msra.mxu0 %v623
      %1644 = vmatprep.subr.bf16.mxu0 0
      %1645 = vmatpush1.bf16.msra.mxu0 %v624
      %1646 = vmatprep.subr.bf16.mxu0 0
      %1647 = vmatpush1.bf16.msra.mxu0 %v625
      %1648 = vmatprep.subr.bf16.mxu0 0
      %1649 = vmatpush1.bf16.msra.mxu0 %v626
      %1650 = vmatprep.subr.bf16.mxu0 0
      %1651 = vmatpush1.bf16.msra.mxu0 %v627
      %1652 = vmatprep.subr.bf16.mxu0 0
      %1653 = vmatpush1.bf16.msra.mxu0 %v628
      %1654 = vmatprep.mubr.bf16.mxu0 %v1208
      %1655 = vmatmul.mubr.bf16.gmra.mrb[0].mxu0 %v1207
      %v1656 = vpop.f32.mrb[0].mxu0
      %v1657 = vadd.f32 %v1496, %v1656
      %v1658 = vpop.f32.mrb[0].mxu0
      %v1659 = vpop.f32.mrb[0].mxu0
      %v1660 = vadd.f32 %v1499, %v1659
      %v1661 = vpop.f32.mrb[0].mxu0
      %1662 = vmatprep.mubr.bf16.mxu0 %v1216
      %1663 = vmatmul.mubr.bf16.gmra.mrb[0].mxu0 %v1215
      %v1664 = vpop.f32.mrb[0].mxu0
      %v1665 = vadd.f32 %v1504, %v1664
      %v1666 = vpop.f32.mrb[0].mxu0
      %v1667 = vpop.f32.mrb[0].mxu0
      %v1668 = vadd.f32 %v1507, %v1667
      %v1669 = vpop.f32.mrb[0].mxu0
      %1670 = vmatprep.mubr.bf16.mxu0 %v1224
      %1671 = vmatmul.mubr.bf16.gmra.mrb[0].mxu0 %v1223
      %v1672 = vpop.f32.mrb[0].mxu0
      %v1673 = vadd.f32 %v1512, %v1672
      %v1674 = vpop.f32.mrb[0].mxu0
      %v1675 = vpop.f32.mrb[0].mxu0
      %v1676 = vadd.f32 %v1515, %v1675
      %v1677 = vpop.f32.mrb[0].mxu0
      %1678 = vmatprep.mubr.bf16.mxu0 %v1232
      %1679 = vmatmul.mubr.bf16.gmra.mrb[0].mxu0 %v1231
      %v1680 = vpop.f32.mrb[0].mxu0
      %v1681 = vadd.f32 %v1520, %v1680
      %v1682 = vpop.f32.mrb[0].mxu0
      %v1683 = vpop.f32.mrb[0].mxu0
      %v1684 = vadd.f32 %v1523, %v1683
      %v1685 = vpop.f32.mrb[0].mxu0
      %1686 = vmatprep.mubr.bf16.mxu0 %v1240
      %1687 = vmatmul.mubr.bf16.gmra.mrb[0].mxu0 %v1239
      %v1688 = vpop.f32.mrb[0].mxu0
      %v1689 = vadd.f32 %v1528, %v1688
      %v1690 = vpop.f32.mrb[0].mxu0
      %v1691 = vpop.f32.mrb[0].mxu0
      %v1692 = vadd.f32 %v1531, %v1691
      %v1693 = vpop.f32.mrb[0].mxu0
      %1694 = vmatprep.mubr.bf16.mxu0 %v1248
      %1695 = vmatmul.mubr.bf16.gmra.mrb[0].mxu0 %v1247
      %v1696 = vpop.f32.mrb[0].mxu0
      %v1697 = vadd.f32 %v1536, %v1696
      %v1698 = vpop.f32.mrb[0].mxu0
      %v1699 = vpop.f32.mrb[0].mxu0
      %v1700 = vadd.f32 %v1539, %v1699
      %v1701 = vpop.f32.mrb[0].mxu0
      %1702 = vmatprep.mubr.bf16.mxu0 %v1256
      %1703 = vmatmul.mubr.bf16.gmra.mrb[0].mxu0 %v1255
      %v1704 = vpop.f32.mrb[0].mxu0
      %v1705 = vadd.f32 %v1544, %v1704
      %v1706 = vpop.f32.mrb[0].mxu0
      %v1707 = vpop.f32.mrb[0].mxu0
      %v1708 = vadd.f32 %v1547, %v1707
      %v1709 = vpop.f32.mrb[0].mxu0
      %1710 = vmatprep.mubr.bf16.mxu0 %v1264
      %1711 = vmatmul.mubr.bf16.gmra.mrb[0].mxu0 %v1263
      %v1712 = vpop.f32.mrb[0].mxu0
      %v1713 = vadd.f32 %v1552, %v1712
      %v1714 = vpop.f32.mrb[0].mxu0
      %v1715 = vpop.f32.mrb[0].mxu0
      %v1716 = vadd.f32 %v1555, %v1715
      %v1717 = vpop.f32.mrb[0].mxu0
      %1718 = vmatprep.mubr.bf16.mxu0 %v1272
      %1719 = vmatmul.mubr.bf16.gmra.mrb[0].mxu0 %v1271
      %v1720 = vpop.f32.mrb[0].mxu0
      %v1721 = vadd.f32 %v1560, %v1720
      %v1722 = vpop.f32.mrb[0].mxu0
      %v1723 = vpop.f32.mrb[0].mxu0
      %v1724 = vadd.f32 %v1563, %v1723
      %v1725 = vpop.f32.mrb[0].mxu0
      %1726 = vmatprep.mubr.bf16.mxu0 %v1280
      %1727 = vmatmul.mubr.bf16.gmra.mrb[0].mxu0 %v1279
      %v1728 = vpop.f32.mrb[0].mxu0
      %v1729 = vadd.f32 %v1568, %v1728
      %v1730 = vpop.f32.mrb[0].mxu0
      %v1731 = vpop.f32.mrb[0].mxu0
      %v1732 = vadd.f32 %v1571, %v1731
      %v1733 = vpop.f32.mrb[0].mxu0
      %1734 = vmatprep.mubr.bf16.mxu0 %v1288
      %1735 = vmatmul.mubr.bf16.gmra.mrb[0].mxu0 %v1287
      %v1736 = vpop.f32.mrb[0].mxu0
      %v1737 = vadd.f32 %v1576, %v1736
      %v1738 = vpop.f32.mrb[0].mxu0
      %v1739 = vpop.f32.mrb[0].mxu0
      %v1740 = vadd.f32 %v1579, %v1739
      %v1741 = vpop.f32.mrb[0].mxu0
      %1742 = vmatprep.mubr.bf16.mxu0 %v1296
      %1743 = vmatmul.mubr.bf16.gmra.mrb[0].mxu0 %v1295
      %v1744 = vpop.f32.mrb[0].mxu0
      %v1745 = vadd.f32 %v1584, %v1744
      %v1746 = vpop.f32.mrb[0].mxu0
      %v1747 = vpop.f32.mrb[0].mxu0
      %v1748 = vadd.f32 %v1587, %v1747
      %v1749 = vpop.f32.mrb[0].mxu0
      %1750 = vmatprep.mubr.bf16.mxu0 %v1304
      %1751 = vmatmul.mubr.bf16.gmra.mrb[0].mxu0 %v1303
      %v1752 = vpop.f32.mrb[0].mxu0
      %v1753 = vadd.f32 %v1592, %v1752
      %v1754 = vpop.f32.mrb[0].mxu0
      %v1755 = vpop.f32.mrb[0].mxu0
      %v1756 = vadd.f32 %v1595, %v1755
      %v1757 = vpop.f32.mrb[0].mxu0
      %1758 = vmatprep.mubr.bf16.mxu0 %v1312
      %1759 = vmatmul.mubr.bf16.gmra.mrb[0].mxu0 %v1311
      %v1760 = vpop.f32.mrb[0].mxu0
      %v1761 = vadd.f32 %v1600, %v1760
      %v1762 = vpop.f32.mrb[0].mxu0
      %v1763 = vpop.f32.mrb[0].mxu0
      %v1764 = vadd.f32 %v1603, %v1763
      %v1765 = vpop.f32.mrb[0].mxu0
      %1766 = vmatprep.mubr.bf16.mxu0 %v1320
      %1767 = vmatmul.mubr.bf16.gmra.mrb[0].mxu0 %v1319
      %v1768 = vpop.f32.mrb[0].mxu0
      %v1769 = vadd.f32 %v1608, %v1768
      %v1770 = vpop.f32.mrb[0].mxu0
      %v1771 = vpop.f32.mrb[0].mxu0
      %v1772 = vadd.f32 %v1611, %v1771
      %v1773 = vpop.f32.mrb[0].mxu0
      %1774 = vmatprep.mubr.bf16.mxu0 %v1328
      %1775 = vmatmul.mubr.bf16.gmra.mrb[0].mxu0 %v1327
      %v1776 = vpop.f32.mrb[0].mxu0
      %v1777 = vadd.f32 %v1616, %v1776
      %v1778 = vpop.f32.mrb[0].mxu0
      %v1779 = vpop.f32.mrb[0].mxu0
      %v1780 = vadd.f32 %v1619, %v1779
      %v1781 = vpop.f32.mrb[0].mxu0
      %1782 = vdwg.mxu0
      %1783 = vmatprep.subr.bf16.mxu0 0
      %1784 = vmatpush1.bf16.msra.mxu0 %v629
      %1785 = vmatprep.subr.bf16.mxu0 0
      %1786 = vmatpush1.bf16.msra.mxu0 %v630
      %1787 = vmatprep.subr.bf16.mxu0 0
      %1788 = vmatpush1.bf16.msra.mxu0 %v631
      %1789 = vmatprep.subr.bf16.mxu0 0
      %1790 = vmatpush1.bf16.msra.mxu0 %v632
      %1791 = vmatprep.subr.bf16.mxu0 0
      %1792 = vmatpush1.bf16.msra.mxu0 %v633
      %1793 = vmatprep.subr.bf16.mxu0 0
      %1794 = vmatpush1.bf16.msra.mxu0 %v634
      %1795 = vmatprep.subr.bf16.mxu0 0
      %1796 = vmatpush1.bf16.msra.mxu0 %v635
      %1797 = vmatprep.subr.bf16.mxu0 0
      %1798 = vmatpush1.bf16.msra.mxu0 %v636
      %1799 = vmatprep.subr.bf16.mxu0 0
      %1800 = vmatpush1.bf16.msra.mxu0 %v637
      %1801 = vmatprep.subr.bf16.mxu0 0
      %1802 = vmatpush1.bf16.msra.mxu0 %v638
      %1803 = vmatprep.subr.bf16.mxu0 0
      %1804 = vmatpush1.bf16.msra.mxu0 %v639
      %1805 = vmatprep.subr.bf16.mxu0 0
      %1806 = vmatpush1.bf16.msra.mxu0 %v640
      %1807 = vmatprep.subr.bf16.mxu0 0
      %1808 = vmatpush1.bf16.msra.mxu0 %v641
      %1809 = vmatprep.subr.bf16.mxu0 0
      %1810 = vmatpush1.bf16.msra.mxu0 %v642
      %1811 = vmatprep.subr.bf16.mxu0 0
      %1812 = vmatpush1.bf16.msra.mxu0 %v643
      %1813 = vmatprep.subr.bf16.mxu0 0
      %1814 = vmatpush1.bf16.msra.mxu0 %v644
      %1815 = vmatprep.mubr.bf16.mxu0 %v1210
      %1816 = vmatmul.mubr.bf16.gmra.mrb[0].mxu0 %v1209
      %v1817 = vpop.f32.mrb[0].mxu0
      %v1818 = vadd.f32 %v1657, %v1817
      %v1819 = vpop.f32.mrb[0].mxu0
      %v1820 = vpop.f32.mrb[0].mxu0
      %v1821 = vadd.f32 %v1660, %v1820
      %v1822 = vpop.f32.mrb[0].mxu0
      %1823 = vmatprep.mubr.bf16.mxu0 %v1218
      %1824 = vmatmul.mubr.bf16.gmra.mrb[0].mxu0 %v1217
      %v1825 = vpop.f32.mrb[0].mxu0
      %v1826 = vadd.f32 %v1665, %v1825
      %v1827 = vpop.f32.mrb[0].mxu0
      %v1828 = vpop.f32.mrb[0].mxu0
      %v1829 = vadd.f32 %v1668, %v1828
      %v1830 = vpop.f32.mrb[0].mxu0
      %1831 = vmatprep.mubr.bf16.mxu0 %v1226
      %1832 = vmatmul.mubr.bf16.gmra.mrb[0].mxu0 %v1225
      %v1833 = vpop.f32.mrb[0].mxu0
      %v1834 = vadd.f32 %v1673, %v1833
      %v1835 = vpop.f32.mrb[0].mxu0
      %v1836 = vpop.f32.mrb[0].mxu0
      %v1837 = vadd.f32 %v1676, %v1836
      %v1838 = vpop.f32.mrb[0].mxu0
      %1839 = vmatprep.mubr.bf16.mxu0 %v1234
      %1840 = vmatmul.mubr.bf16.gmra.mrb[0].mxu0 %v1233
      %v1841 = vpop.f32.mrb[0].mxu0
      %v1842 = vadd.f32 %v1681, %v1841
      %v1843 = vpop.f32.mrb[0].mxu0
      %v1844 = vpop.f32.mrb[0].mxu0
      %v1845 = vadd.f32 %v1684, %v1844
      %v1846 = vpop.f32.mrb[0].mxu0
      %1847 = vmatprep.mubr.bf16.mxu0 %v1242
      %1848 = vmatmul.mubr.bf16.gmra.mrb[0].mxu0 %v1241
      %v1849 = vpop.f32.mrb[0].mxu0
      %v1850 = vadd.f32 %v1689, %v1849
      %v1851 = vpop.f32.mrb[0].mxu0
      %v1852 = vpop.f32.mrb[0].mxu0
      %v1853 = vadd.f32 %v1692, %v1852
      %v1854 = vpop.f32.mrb[0].mxu0
      %1855 = vmatprep.mubr.bf16.mxu0 %v1250
      %1856 = vmatmul.mubr.bf16.gmra.mrb[0].mxu0 %v1249
      %v1857 = vpop.f32.mrb[0].mxu0
      %v1858 = vadd.f32 %v1697, %v1857
      %v1859 = vpop.f32.mrb[0].mxu0
      %v1860 = vpop.f32.mrb[0].mxu0
      %v1861 = vadd.f32 %v1700, %v1860
      %v1862 = vpop.f32.mrb[0].mxu0
      %1863 = vmatprep.mubr.bf16.mxu0 %v1258
      %1864 = vmatmul.mubr.bf16.gmra.mrb[0].mxu0 %v1257
      %v1865 = vpop.f32.mrb[0].mxu0
      %v1866 = vadd.f32 %v1705, %v1865
      %v1867 = vpop.f32.mrb[0].mxu0
      %v1868 = vpop.f32.mrb[0].mxu0
      %v1869 = vadd.f32 %v1708, %v1868
      %v1870 = vpop.f32.mrb[0].mxu0
      %1871 = vmatprep.mubr.bf16.mxu0 %v1266
      %1872 = vmatmul.mubr.bf16.gmra.mrb[0].mxu0 %v1265
      %v1873 = vpop.f32.mrb[0].mxu0
      %v1874 = vadd.f32 %v1713, %v1873
      %v1875 = vpop.f32.mrb[0].mxu0
      %v1876 = vpop.f32.mrb[0].mxu0
      %v1877 = vadd.f32 %v1716, %v1876
      %v1878 = vpop.f32.mrb[0].mxu0
      %1879 = vmatprep.mubr.bf16.mxu0 %v1274
      %1880 = vmatmul.mubr.bf16.gmra.mrb[0].mxu0 %v1273
      %v1881 = vpop.f32.mrb[0].mxu0
      %v1882 = vadd.f32 %v1721, %v1881
      %v1883 = vpop.f32.mrb[0].mxu0
      %v1884 = vpop.f32.mrb[0].mxu0
      %v1885 = vadd.f32 %v1724, %v1884
      %v1886 = vpop.f32.mrb[0].mxu0
      %1887 = vmatprep.mubr.bf16.mxu0 %v1282
      %1888 = vmatmul.mubr.bf16.gmra.mrb[0].mxu0 %v1281
      %v1889 = vpop.f32.mrb[0].mxu0
      %v1890 = vadd.f32 %v1729, %v1889
      %v1891 = vpop.f32.mrb[0].mxu0
      %v1892 = vpop.f32.mrb[0].mxu0
      %v1893 = vadd.f32 %v1732, %v1892
      %v1894 = vpop.f32.mrb[0].mxu0
      %1895 = vmatprep.mubr.bf16.mxu0 %v1290
      %1896 = vmatmul.mubr.bf16.gmra.mrb[0].mxu0 %v1289
      %v1897 = vpop.f32.mrb[0].mxu0
      %v1898 = vadd.f32 %v1737, %v1897
      %v1899 = vpop.f32.mrb[0].mxu0
      %v1900 = vpop.f32.mrb[0].mxu0
      %v1901 = vadd.f32 %v1740, %v1900
      %v1902 = vpop.f32.mrb[0].mxu0
      %1903 = vmatprep.mubr.bf16.mxu0 %v1298
      %1904 = vmatmul.mubr.bf16.gmra.mrb[0].mxu0 %v1297
      %v1905 = vpop.f32.mrb[0].mxu0
      %v1906 = vadd.f32 %v1745, %v1905
      %v1907 = vpop.f32.mrb[0].mxu0
      %v1908 = vpop.f32.mrb[0].mxu0
      %v1909 = vadd.f32 %v1748, %v1908
      %v1910 = vpop.f32.mrb[0].mxu0
      %1911 = vmatprep.mubr.bf16.mxu0 %v1306
      %1912 = vmatmul.mubr.bf16.gmra.mrb[0].mxu0 %v1305
      %v1913 = vpop.f32.mrb[0].mxu0
      %v1914 = vadd.f32 %v1753, %v1913
      %v1915 = vpop.f32.mrb[0].mxu0
      %v1916 = vpop.f32.mrb[0].mxu0
      %v1917 = vadd.f32 %v1756, %v1916
      %v1918 = vpop.f32.mrb[0].mxu0
      %1919 = vmatprep.mubr.bf16.mxu0 %v1314
      %1920 = vmatmul.mubr.bf16.gmra.mrb[0].mxu0 %v1313
      %v1921 = vpop.f32.mrb[0].mxu0
      %v1922 = vadd.f32 %v1761, %v1921
      %v1923 = vpop.f32.mrb[0].mxu0
      %v1924 = vpop.f32.mrb[0].mxu0
      %v1925 = vadd.f32 %v1764, %v1924
      %v1926 = vpop.f32.mrb[0].mxu0
      %1927 = vmatprep.mubr.bf16.mxu0 %v1322
      %1928 = vmatmul.mubr.bf16.gmra.mrb[0].mxu0 %v1321
      %v1929 = vpop.f32.mrb[0].mxu0
      %v1930 = vadd.f32 %v1769, %v1929
      %v1931 = vpop.f32.mrb[0].mxu0
      %v1932 = vpop.f32.mrb[0].mxu0
      %v1933 = vadd.f32 %v1772, %v1932
      %v1934 = vpop.f32.mrb[0].mxu0
      %1935 = vmatprep.mubr.bf16.mxu0 %v1330
      %1936 = vmatmul.mubr.bf16.gmra.mrb[0].mxu0 %v1329
      %v1937 = vpop.f32.mrb[0].mxu0
      %v1938 = vadd.f32 %v1777, %v1937
      %v1939 = vpop.f32.mrb[0].mxu0
      %v1940 = vpop.f32.mrb[0].mxu0
      %v1941 = vadd.f32 %v1780, %v1940
      %v1942 = vpop.f32.mrb[0].mxu0
      %1943 = vdwg.mxu0
      %1944 = vmatprep.subr.bf16.mxu0 0
      %1945 = vmatpush1.bf16.msra.mxu0 %v645
      %1946 = vmatprep.subr.bf16.mxu0 0
      %1947 = vmatpush1.bf16.msra.mxu0 %v646
      %1948 = vmatprep.subr.bf16.mxu0 0
      %1949 = vmatpush1.bf16.msra.mxu0 %v647
      %1950 = vmatprep.subr.bf16.mxu0 0
      %1951 = vmatpush1.bf16.msra.mxu0 %v648
      %1952 = vmatprep.subr.bf16.mxu0 0
      %1953 = vmatpush1.bf16.msra.mxu0 %v649
      %1954 = vmatprep.subr.bf16.mxu0 0
      %1955 = vmatpush1.bf16.msra.mxu0 %v650
      %1956 = vmatprep.subr.bf16.mxu0 0
      %1957 = vmatpush1.bf16.msra.mxu0 %v651
      %1958 = vmatprep.subr.bf16.mxu0 0
      %1959 = vmatpush1.bf16.msra.mxu0 %v652
      %1960 = vmatprep.subr.bf16.mxu0 0
      %1961 = vmatpush1.bf16.msra.mxu0 %v653
      %1962 = vmatprep.subr.bf16.mxu0 0
      %1963 = vmatpush1.bf16.msra.mxu0 %v654
      %1964 = vmatprep.subr.bf16.mxu0 0
      %1965 = vmatpush1.bf16.msra.mxu0 %v655
      %1966 = vmatprep.subr.bf16.mxu0 0
      %1967 = vmatpush1.bf16.msra.mxu0 %v656
      %1968 = vmatprep.subr.bf16.mxu0 0
      %1969 = vmatpush1.bf16.msra.mxu0 %v657
      %1970 = vmatprep.subr.bf16.mxu0 0
      %1971 = vmatpush1.bf16.msra.mxu0 %v658
      %1972 = vmatprep.subr.bf16.mxu0 0
      %1973 = vmatpush1.bf16.msra.mxu0 %v659
      %1974 = vmatprep.subr.bf16.mxu0 0
      %1975 = vmatpush1.bf16.msra.mxu0 %v660
      %1976 = vmatprep.mubr.bf16.mxu0 %v1212
      %1977 = vmatmul.mubr.bf16.gmra.mrb[0].mxu0 %v1211
      %v1978 = vpop.f32.mrb[0].mxu0
      %v1979 = vadd.f32 %v1818, %v1978
      %v1980 = vpop.f32.mrb[0].mxu0
      %v1981 = vpop.f32.mrb[0].mxu0
      %v1982 = vadd.f32 %v1821, %v1981
      %v1983 = vpop.f32.mrb[0].mxu0
      %1984 = vmatprep.mubr.bf16.mxu0 %v1220
      %1985 = vmatmul.mubr.bf16.gmra.mrb[0].mxu0 %v1219
      %v1986 = vpop.f32.mrb[0].mxu0
      %v1987 = vadd.f32 %v1826, %v1986
      %v1988 = vpop.f32.mrb[0].mxu0
      %v1989 = vpop.f32.mrb[0].mxu0
      %v1990 = vadd.f32 %v1829, %v1989
      %v1991 = vpop.f32.mrb[0].mxu0
      %1992 = vmatprep.mubr.bf16.mxu0 %v1228
      %1993 = vmatmul.mubr.bf16.gmra.mrb[0].mxu0 %v1227
      %v1994 = vpop.f32.mrb[0].mxu0
      %v1995 = vadd.f32 %v1834, %v1994
      %v1996 = vpop.f32.mrb[0].mxu0
      %v1997 = vpop.f32.mrb[0].mxu0
      %v1998 = vadd.f32 %v1837, %v1997
      %v1999 = vpop.f32.mrb[0].mxu0
      %2000 = vmatprep.mubr.bf16.mxu0 %v1236
      %2001 = vmatmul.mubr.bf16.gmra.mrb[0].mxu0 %v1235
      %v2002 = vpop.f32.mrb[0].mxu0
      %v2003 = vadd.f32 %v1842, %v2002
      %v2004 = vpop.f32.mrb[0].mxu0
      %v2005 = vpop.f32.mrb[0].mxu0
      %v2006 = vadd.f32 %v1845, %v2005
      %v2007 = vpop.f32.mrb[0].mxu0
      %2008 = vmatprep.mubr.bf16.mxu0 %v1244
      %2009 = vmatmul.mubr.bf16.gmra.mrb[0].mxu0 %v1243
      %v2010 = vpop.f32.mrb[0].mxu0
      %v2011 = vadd.f32 %v1850, %v2010
      %v2012 = vpop.f32.mrb[0].mxu0
      %v2013 = vpop.f32.mrb[0].mxu0
      %v2014 = vadd.f32 %v1853, %v2013
      %v2015 = vpop.f32.mrb[0].mxu0
      %2016 = vmatprep.mubr.bf16.mxu0 %v1252
      %2017 = vmatmul.mubr.bf16.gmra.mrb[0].mxu0 %v1251
      %v2018 = vpop.f32.mrb[0].mxu0
      %v2019 = vadd.f32 %v1858, %v2018
      %v2020 = vpop.f32.mrb[0].mxu0
      %v2021 = vpop.f32.mrb[0].mxu0
      %v2022 = vadd.f32 %v1861, %v2021
      %v2023 = vpop.f32.mrb[0].mxu0
      %2024 = vmatprep.mubr.bf16.mxu0 %v1260
      %2025 = vmatmul.mubr.bf16.gmra.mrb[0].mxu0 %v1259
      %v2026 = vpop.f32.mrb[0].mxu0
      %v2027 = vadd.f32 %v1866, %v2026
      %v2028 = vpop.f32.mrb[0].mxu0
      %v2029 = vpop.f32.mrb[0].mxu0
      %v2030 = vadd.f32 %v1869, %v2029
      %v2031 = vpop.f32.mrb[0].mxu0
      %2032 = vmatprep.mubr.bf16.mxu0 %v1268
      %2033 = vmatmul.mubr.bf16.gmra.mrb[0].mxu0 %v1267
      %v2034 = vpop.f32.mrb[0].mxu0
      %v2035 = vadd.f32 %v1874, %v2034
      %v2036 = vpop.f32.mrb[0].mxu0
      %v2037 = vpop.f32.mrb[0].mxu0
      %v2038 = vadd.f32 %v1877, %v2037
      %v2039 = vpop.f32.mrb[0].mxu0
      %2040 = vmatprep.mubr.bf16.mxu0 %v1276
      %2041 = vmatmul.mubr.bf16.gmra.mrb[0].mxu0 %v1275
      %v2042 = vpop.f32.mrb[0].mxu0
      %v2043 = vadd.f32 %v1882, %v2042
      %v2044 = vpop.f32.mrb[0].mxu0
      %v2045 = vpop.f32.mrb[0].mxu0
      %v2046 = vadd.f32 %v1885, %v2045
      %v2047 = vpop.f32.mrb[0].mxu0
      %2048 = vmatprep.mubr.bf16.mxu0 %v1284
      %2049 = vmatmul.mubr.bf16.gmra.mrb[0].mxu0 %v1283
      %v2050 = vpop.f32.mrb[0].mxu0
      %v2051 = vadd.f32 %v1890, %v2050
      %v2052 = vpop.f32.mrb[0].mxu0
      %v2053 = vpop.f32.mrb[0].mxu0
      %v2054 = vadd.f32 %v1893, %v2053
      %v2055 = vpop.f32.mrb[0].mxu0
      %2056 = vmatprep.mubr.bf16.mxu0 %v1292
      %2057 = vmatmul.mubr.bf16.gmra.mrb[0].mxu0 %v1291
      %v2058 = vpop.f32.mrb[0].mxu0
      %v2059 = vadd.f32 %v1898, %v2058
      %v2060 = vpop.f32.mrb[0].mxu0
      %v2061 = vpop.f32.mrb[0].mxu0
      %v2062 = vadd.f32 %v1901, %v2061
      %v2063 = vpop.f32.mrb[0].mxu0
      %2064 = vmatprep.mubr.bf16.mxu0 %v1300
      %2065 = vmatmul.mubr.bf16.gmra.mrb[0].mxu0 %v1299
      %v2066 = vpop.f32.mrb[0].mxu0
      %v2067 = vadd.f32 %v1906, %v2066
      %v2068 = vpop.f32.mrb[0].mxu0
      %v2069 = vpop.f32.mrb[0].mxu0
      %v2070 = vadd.f32 %v1909, %v2069
      %v2071 = vpop.f32.mrb[0].mxu0
      %2072 = vmatprep.mubr.bf16.mxu0 %v1308
      %2073 = vmatmul.mubr.bf16.gmra.mrb[0].mxu0 %v1307
      %v2074 = vpop.f32.mrb[0].mxu0
      %v2075 = vadd.f32 %v1914, %v2074
      %v2076 = vpop.f32.mrb[0].mxu0
      %v2077 = vpop.f32.mrb[0].mxu0
      %v2078 = vadd.f32 %v1917, %v2077
      %v2079 = vpop.f32.mrb[0].mxu0
      %2080 = vmatprep.mubr.bf16.mxu0 %v1316
      %2081 = vmatmul.mubr.bf16.gmra.mrb[0].mxu0 %v1315
      %v2082 = vpop.f32.mrb[0].mxu0
      %v2083 = vadd.f32 %v1922, %v2082
      %v2084 = vpop.f32.mrb[0].mxu0
      %v2085 = vpop.f32.mrb[0].mxu0
      %v2086 = vadd.f32 %v1925, %v2085
      %v2087 = vpop.f32.mrb[0].mxu0
      %2088 = vmatprep.mubr.bf16.mxu0 %v1324
      %2089 = vmatmul.mubr.bf16.gmra.mrb[0].mxu0 %v1323
      %v2090 = vpop.f32.mrb[0].mxu0
      %v2091 = vadd.f32 %v1930, %v2090
      %v2092 = vpop.f32.mrb[0].mxu0
      %v2093 = vpop.f32.mrb[0].mxu0
      %v2094 = vadd.f32 %v1933, %v2093
      %v2095 = vpop.f32.mrb[0].mxu0
      %2096 = vmatprep.mubr.bf16.mxu0 %v1332
      %2097 = vmatmul.mubr.bf16.gmra.mrb[0].mxu0 %v1331
      %v2098 = vpop.f32.mrb[0].mxu0
      %v2099 = vadd.f32 %v1938, %v2098
      %v2100 = vpop.f32.mrb[0].mxu0
      %v2101 = vpop.f32.mrb[0].mxu0
      %v2102 = vadd.f32 %v1941, %v2101
      %v2103 = vpop.f32.mrb[0].mxu0
      %2104 = vdwg.mxu0
      %vm2105 = vcmask 523264
      %2106 = vst.msk [vmem:[%s299] sm:$0xff] %vm2105, %v1979
      %2107 = vst.msk [vmem:[%s299 + $0x8] sm:$0xff] %vm2105, %v1982
      %2108 = vst.msk [vmem:[%s299 + $0x10] sm:$0xff] %vm2105, %v1987
      %2109 = vst.msk [vmem:[%s299 + $0x18] sm:$0xff] %vm2105, %v1990
      %2110 = vst.msk [vmem:[%s299 + $0x20] sm:$0xff] %vm2105, %v1995
      %2111 = vst.msk [vmem:[%s299 + $0x28] sm:$0xff] %vm2105, %v1998
      %2112 = vst.msk [vmem:[%s299 + $0x30] sm:$0xff] %vm2105, %v2003
      %2113 = vst.msk [vmem:[%s299 + $0x38] sm:$0xff] %vm2105, %v2006
      %2114 = vst.msk [vmem:[%s299 + $0x40] sm:$0xff] %vm2105, %v2011
      %2115 = vst.msk [vmem:[%s299 + $0x48] sm:$0xff] %vm2105, %v2014
      %2116 = vst.msk [vmem:[%s299 + $0x50] sm:$0xff] %vm2105, %v2019
      %2117 = vst.msk [vmem:[%s299 + $0x58] sm:$0xff] %vm2105, %v2022
      %2118 = vst.msk [vmem:[%s299 + $0x60] sm:$0xff] %vm2105, %v2027
      %2119 = vst.msk [vmem:[%s299 + $0x68] sm:$0xff] %vm2105, %v2030
      %2120 = vst.msk [vmem:[%s299 + $0x70] sm:$0xff] %vm2105, %v2035
      %2121 = vst.msk [vmem:[%s299 + $0x78] sm:$0xff] %vm2105, %v2038
      %2122 = vst.msk [vmem:[%s299 + $0x80] sm:$0xff] %vm2105, %v2043
      %2123 = vst.msk [vmem:[%s299 + $0x88] sm:$0xff] %vm2105, %v2046
      %2124 = vst.msk [vmem:[%s299 + $0x90] sm:$0xff] %vm2105, %v2051
      %2125 = vst.msk [vmem:[%s299 + $0x98] sm:$0xff] %vm2105, %v2054
      %2126 = vst.msk [vmem:[%s299 + $0xa0] sm:$0xff] %vm2105, %v2059
      %2127 = vst.msk [vmem:[%s299 + $0xa8] sm:$0xff] %vm2105, %v2062
      %2128 = vst.msk [vmem:[%s299 + $0xb0] sm:$0xff] %vm2105, %v2067
      %2129 = vst.msk [vmem:[%s299 + $0xb8] sm:$0xff] %vm2105, %v2070
      %2130 = vst.msk [vmem:[%s299 + $0xc0] sm:$0xff] %vm2105, %v2075
      %2131 = vst.msk [vmem:[%s299 + $0xc8] sm:$0xff] %vm2105, %v2078
      %2132 = vst.msk [vmem:[%s299 + $0xd0] sm:$0xff] %vm2105, %v2083
      %2133 = vst.msk [vmem:[%s299 + $0xd8] sm:$0xff] %vm2105, %v2086
      %2134 = vst.msk [vmem:[%s299 + $0xe0] sm:$0xff] %vm2105, %v2091
      %2135 = vst.msk [vmem:[%s299 + $0xe8] sm:$0xff] %vm2105, %v2094
      %2136 = vst.msk [vmem:[%s299 + $0xf0] sm:$0xff] %vm2105, %v2099
      %2137 = vst.msk [vmem:[%s299 + $0xf8] sm:$0xff] %vm2105, %v2102
      %v2138 = vld [vmem:[%s291] sm:$0xff]
      %v2139 = vld [vmem:[%s291 + $0x8] sm:$0xff]
      %v2140 = vld [vmem:[%s291 + $0x10] sm:$0xff]
      %v2141 = vld [vmem:[%s291 + $0x18] sm:$0xff]
      %v2142 = vld [vmem:[%s291 + $0x20] sm:$0xff]
      %v2143 = vld [vmem:[%s291 + $0x28] sm:$0xff]
      %v2144 = vld [vmem:[%s291 + $0x30] sm:$0xff]
      %v2145 = vld [vmem:[%s291 + $0x38] sm:$0xff]
      %v2146 = vld [vmem:[%s291 + $0x40] sm:$0xff]
      %v2147 = vld [vmem:[%s291 + $0x48] sm:$0xff]
      %v2148 = vld [vmem:[%s291 + $0x50] sm:$0xff]
      %v2149 = vld [vmem:[%s291 + $0x58] sm:$0xff]
      %v2150 = vld [vmem:[%s291 + $0x60] sm:$0xff]
      %v2151 = vld [vmem:[%s291 + $0x68] sm:$0xff]
      %v2152 = vld [vmem:[%s291 + $0x70] sm:$0xff]
      %v2153 = vld [vmem:[%s291 + $0x78] sm:$0xff]
      %v2154 = vld [vmem:[%s291 + $0x80] sm:$0xff]
      %v2155 = vld [vmem:[%s291 + $0x88] sm:$0xff]
      %v2156 = vld [vmem:[%s291 + $0x90] sm:$0xff]
      %v2157 = vld [vmem:[%s291 + $0x98] sm:$0xff]
      %v2158 = vld [vmem:[%s291 + $0xa0] sm:$0xff]
      %v2159 = vld [vmem:[%s291 + $0xa8] sm:$0xff]
      %v2160 = vld [vmem:[%s291 + $0xb0] sm:$0xff]
      %v2161 = vld [vmem:[%s291 + $0xb8] sm:$0xff]
      %v2162 = vld [vmem:[%s291 + $0xc0] sm:$0xff]
      %v2163 = vld [vmem:[%s291 + $0xc8] sm:$0xff]
      %v2164 = vld [vmem:[%s291 + $0xd0] sm:$0xff]
      %v2165 = vld [vmem:[%s291 + $0xd8] sm:$0xff]
      %v2166 = vld [vmem:[%s291 + $0xe0] sm:$0xff]
      %v2167 = vld [vmem:[%s291 + $0xe8] sm:$0xff]
      %v2168 = vld [vmem:[%s291 + $0xf0] sm:$0xff]
      %v2169 = vld [vmem:[%s291 + $0xf8] sm:$0xff]
      %v2170 = vld [vmem:[%s291 + $0x100] sm:$0xff]
      %v2171 = vld [vmem:[%s291 + $0x108] sm:$0xff]
      %v2172 = vld [vmem:[%s291 + $0x110] sm:$0xff]
      %v2173 = vld [vmem:[%s291 + $0x118] sm:$0xff]
      %v2174 = vld [vmem:[%s291 + $0x120] sm:$0xff]
      %v2175 = vld [vmem:[%s291 + $0x128] sm:$0xff]
      %v2176 = vld [vmem:[%s291 + $0x130] sm:$0xff]
      %v2177 = vld [vmem:[%s291 + $0x138] sm:$0xff]
      %v2178 = vld [vmem:[%s291 + $0x140] sm:$0xff]
      %v2179 = vld [vmem:[%s291 + $0x148] sm:$0xff]
      %v2180 = vld [vmem:[%s291 + $0x150] sm:$0xff]
      %v2181 = vld [vmem:[%s291 + $0x158] sm:$0xff]
      %v2182 = vld [vmem:[%s291 + $0x160] sm:$0xff]
      %v2183 = vld [vmem:[%s291 + $0x168] sm:$0xff]
      %v2184 = vld [vmem:[%s291 + $0x170] sm:$0xff]
      %v2185 = vld [vmem:[%s291 + $0x178] sm:$0xff]
      %v2186 = vld [vmem:[%s291 + $0x180] sm:$0xff]
      %v2187 = vld [vmem:[%s291 + $0x188] sm:$0xff]
      %v2188 = vld [vmem:[%s291 + $0x190] sm:$0xff]
      %v2189 = vld [vmem:[%s291 + $0x198] sm:$0xff]
      %v2190 = vld [vmem:[%s291 + $0x1a0] sm:$0xff]
      %v2191 = vld [vmem:[%s291 + $0x1a8] sm:$0xff]
      %v2192 = vld [vmem:[%s291 + $0x1b0] sm:$0xff]
      %v2193 = vld [vmem:[%s291 + $0x1b8] sm:$0xff]
      %v2194 = vld [vmem:[%s291 + $0x1c0] sm:$0xff]
      %v2195 = vld [vmem:[%s291 + $0x1c8] sm:$0xff]
      %v2196 = vld [vmem:[%s291 + $0x1d0] sm:$0xff]
      %v2197 = vld [vmem:[%s291 + $0x1d8] sm:$0xff]
      %v2198 = vld [vmem:[%s291 + $0x1e0] sm:$0xff]
      %v2199 = vld [vmem:[%s291 + $0x1e8] sm:$0xff]
      %v2200 = vld [vmem:[%s291 + $0x1f0] sm:$0xff]
      %v2201 = vld [vmem:[%s291 + $0x1f8] sm:$0xff]
      %v2202 = vld [vmem:[%s291 + $0x200] sm:$0xff]
      %v2203 = vld [vmem:[%s291 + $0x208] sm:$0xff]
      %v2204 = vld [vmem:[%s291 + $0x210] sm:$0xff]
      %v2205 = vld [vmem:[%s291 + $0x218] sm:$0xff]
      %v2206 = vld [vmem:[%s291 + $0x220] sm:$0xff]
      %v2207 = vld [vmem:[%s291 + $0x228] sm:$0xff]
      %v2208 = vld [vmem:[%s291 + $0x230] sm:$0xff]
      %v2209 = vld [vmem:[%s291 + $0x238] sm:$0xff]
      %v2210 = vld [vmem:[%s291 + $0x240] sm:$0xff]
      %v2211 = vld [vmem:[%s291 + $0x248] sm:$0xff]
      %v2212 = vld [vmem:[%s291 + $0x250] sm:$0xff]
      %v2213 = vld [vmem:[%s291 + $0x258] sm:$0xff]
      %v2214 = vld [vmem:[%s291 + $0x260] sm:$0xff]
      %v2215 = vld [vmem:[%s291 + $0x268] sm:$0xff]
      %v2216 = vld [vmem:[%s291 + $0x270] sm:$0xff]
      %v2217 = vld [vmem:[%s291 + $0x278] sm:$0xff]
      %v2218 = vld [vmem:[%s291 + $0x280] sm:$0xff]
      %v2219 = vld [vmem:[%s291 + $0x288] sm:$0xff]
      %v2220 = vld [vmem:[%s291 + $0x290] sm:$0xff]
      %v2221 = vld [vmem:[%s291 + $0x298] sm:$0xff]
      %v2222 = vld [vmem:[%s291 + $0x2a0] sm:$0xff]
      %v2223 = vld [vmem:[%s291 + $0x2a8] sm:$0xff]
      %v2224 = vld [vmem:[%s291 + $0x2b0] sm:$0xff]
      %v2225 = vld [vmem:[%s291 + $0x2b8] sm:$0xff]
      %v2226 = vld [vmem:[%s291 + $0x2c0] sm:$0xff]
      %v2227 = vld [vmem:[%s291 + $0x2c8] sm:$0xff]
      %v2228 = vld [vmem:[%s291 + $0x2d0] sm:$0xff]
      %v2229 = vld [vmem:[%s291 + $0x2d8] sm:$0xff]
      %v2230 = vld [vmem:[%s291 + $0x2e0] sm:$0xff]
      %v2231 = vld [vmem:[%s291 + $0x2e8] sm:$0xff]
      %v2232 = vld [vmem:[%s291 + $0x2f0] sm:$0xff]
      %v2233 = vld [vmem:[%s291 + $0x2f8] sm:$0xff]
      %v2234 = vld [vmem:[%s291 + $0x300] sm:$0xff]
      %v2235 = vld [vmem:[%s291 + $0x308] sm:$0xff]
      %v2236 = vld [vmem:[%s291 + $0x310] sm:$0xff]
      %v2237 = vld [vmem:[%s291 + $0x318] sm:$0xff]
      %v2238 = vld [vmem:[%s291 + $0x320] sm:$0xff]
      %v2239 = vld [vmem:[%s291 + $0x328] sm:$0xff]
      %v2240 = vld [vmem:[%s291 + $0x330] sm:$0xff]
      %v2241 = vld [vmem:[%s291 + $0x338] sm:$0xff]
      %v2242 = vld [vmem:[%s291 + $0x340] sm:$0xff]
      %v2243 = vld [vmem:[%s291 + $0x348] sm:$0xff]
      %v2244 = vld [vmem:[%s291 + $0x350] sm:$0xff]
      %v2245 = vld [vmem:[%s291 + $0x358] sm:$0xff]
      %v2246 = vld [vmem:[%s291 + $0x360] sm:$0xff]
      %v2247 = vld [vmem:[%s291 + $0x368] sm:$0xff]
      %v2248 = vld [vmem:[%s291 + $0x370] sm:$0xff]
      %v2249 = vld [vmem:[%s291 + $0x378] sm:$0xff]
      %v2250 = vld [vmem:[%s291 + $0x380] sm:$0xff]
      %v2251 = vld [vmem:[%s291 + $0x388] sm:$0xff]
      %v2252 = vld [vmem:[%s291 + $0x390] sm:$0xff]
      %v2253 = vld [vmem:[%s291 + $0x398] sm:$0xff]
      %v2254 = vld [vmem:[%s291 + $0x3a0] sm:$0xff]
      %v2255 = vld [vmem:[%s291 + $0x3a8] sm:$0xff]
      %v2256 = vld [vmem:[%s291 + $0x3b0] sm:$0xff]
      %v2257 = vld [vmem:[%s291 + $0x3b8] sm:$0xff]
      %v2258 = vld [vmem:[%s291 + $0x3c0] sm:$0xff]
      %v2259 = vld [vmem:[%s291 + $0x3c8] sm:$0xff]
      %v2260 = vld [vmem:[%s291 + $0x3d0] sm:$0xff]
      %v2261 = vld [vmem:[%s291 + $0x3d8] sm:$0xff]
      %v2262 = vld [vmem:[%s291 + $0x3e0] sm:$0xff]
      %v2263 = vld [vmem:[%s291 + $0x3e8] sm:$0xff]
      %v2264 = vld [vmem:[%s291 + $0x3f0] sm:$0xff]
      %v2265 = vld [vmem:[%s291 + $0x3f8] sm:$0xff]
      %v2266 = vpack.c.bf16 %v2139, %v2138
      %v2267 = vpack.c.bf16 %v2141, %v2140
      %v2268 = vpack.c.bf16 %v2143, %v2142
      %v2269 = vpack.c.bf16 %v2145, %v2144
      %v2270 = vpack.c.bf16 %v2147, %v2146
      %v2271 = vpack.c.bf16 %v2149, %v2148
      %v2272 = vpack.c.bf16 %v2151, %v2150
      %v2273 = vpack.c.bf16 %v2153, %v2152
      %v2274 = vpack.c.bf16 %v2155, %v2154
      %v2275 = vpack.c.bf16 %v2157, %v2156
      %v2276 = vpack.c.bf16 %v2159, %v2158
      %v2277 = vpack.c.bf16 %v2161, %v2160
      %v2278 = vpack.c.bf16 %v2163, %v2162
      %v2279 = vpack.c.bf16 %v2165, %v2164
      %v2280 = vpack.c.bf16 %v2167, %v2166
      %v2281 = vpack.c.bf16 %v2169, %v2168
      %v2282 = vpack.c.bf16 %v2171, %v2170
      %v2283 = vpack.c.bf16 %v2173, %v2172
      %v2284 = vpack.c.bf16 %v2175, %v2174
      %v2285 = vpack.c.bf16 %v2177, %v2176
      %v2286 = vpack.c.bf16 %v2179, %v2178
      %v2287 = vpack.c.bf16 %v2181, %v2180
      %v2288 = vpack.c.bf16 %v2183, %v2182
      %v2289 = vpack.c.bf16 %v2185, %v2184
      %v2290 = vpack.c.bf16 %v2187, %v2186
      %v2291 = vpack.c.bf16 %v2189, %v2188
      %v2292 = vpack.c.bf16 %v2191, %v2190
      %v2293 = vpack.c.bf16 %v2193, %v2192
      %v2294 = vpack.c.bf16 %v2195, %v2194
      %v2295 = vpack.c.bf16 %v2197, %v2196
      %v2296 = vpack.c.bf16 %v2199, %v2198
      %v2297 = vpack.c.bf16 %v2201, %v2200
      %v2298 = vpack.c.bf16 %v2203, %v2202
      %v2299 = vpack.c.bf16 %v2205, %v2204
      %v2300 = vpack.c.bf16 %v2207, %v2206
      %v2301 = vpack.c.bf16 %v2209, %v2208
      %v2302 = vpack.c.bf16 %v2211, %v2210
      %v2303 = vpack.c.bf16 %v2213, %v2212
      %v2304 = vpack.c.bf16 %v2215, %v2214
      %v2305 = vpack.c.bf16 %v2217, %v2216
      %v2306 = vpack.c.bf16 %v2219, %v2218
      %v2307 = vpack.c.bf16 %v2221, %v2220
      %v2308 = vpack.c.bf16 %v2223, %v2222
      %v2309 = vpack.c.bf16 %v2225, %v2224
      %v2310 = vpack.c.bf16 %v2227, %v2226
      %v2311 = vpack.c.bf16 %v2229, %v2228
      %v2312 = vpack.c.bf16 %v2231, %v2230
      %v2313 = vpack.c.bf16 %v2233, %v2232
      %v2314 = vpack.c.bf16 %v2235, %v2234
      %v2315 = vpack.c.bf16 %v2237, %v2236
      %v2316 = vpack.c.bf16 %v2239, %v2238
      %v2317 = vpack.c.bf16 %v2241, %v2240
      %v2318 = vpack.c.bf16 %v2243, %v2242
      %v2319 = vpack.c.bf16 %v2245, %v2244
      %v2320 = vpack.c.bf16 %v2247, %v2246
      %v2321 = vpack.c.bf16 %v2249, %v2248
      %v2322 = vpack.c.bf16 %v2251, %v2250
      %v2323 = vpack.c.bf16 %v2253, %v2252
      %v2324 = vpack.c.bf16 %v2255, %v2254
      %v2325 = vpack.c.bf16 %v2257, %v2256
      %v2326 = vpack.c.bf16 %v2259, %v2258
      %v2327 = vpack.c.bf16 %v2261, %v2260
      %v2328 = vpack.c.bf16 %v2263, %v2262
      %v2329 = vpack.c.bf16 %v2265, %v2264
      %2330 = vmatprep.subr.bf16.mxu0 0
      %2331 = vmatpush1.bf16.msra.mxu0 %v2266
      %2332 = vmatprep.subr.bf16.mxu0 0
      %2333 = vmatpush1.bf16.msra.mxu0 %v2267
      %2334 = vmatprep.subr.bf16.mxu0 0
      %2335 = vmatpush1.bf16.msra.mxu0 %v2268
      %2336 = vmatprep.subr.bf16.mxu0 0
      %2337 = vmatpush1.bf16.msra.mxu0 %v2269
      %2338 = vmatprep.subr.bf16.mxu0 0
      %2339 = vmatpush1.bf16.msra.mxu0 %v2270
      %2340 = vmatprep.subr.bf16.mxu0 0
      %2341 = vmatpush1.bf16.msra.mxu0 %v2271
      %2342 = vmatprep.subr.bf16.mxu0 0
      %2343 = vmatpush1.bf16.msra.mxu0 %v2272
      %2344 = vmatprep.subr.bf16.mxu0 0
      %2345 = vmatpush1.bf16.msra.mxu0 %v2273
      %2346 = vmatprep.subr.bf16.mxu0 0
      %2347 = vmatpush1.bf16.msra.mxu0 %v2274
      %2348 = vmatprep.subr.bf16.mxu0 0
      %2349 = vmatpush1.bf16.msra.mxu0 %v2275
      %2350 = vmatprep.subr.bf16.mxu0 0
      %2351 = vmatpush1.bf16.msra.mxu0 %v2276
      %2352 = vmatprep.subr.bf16.mxu0 0
      %2353 = vmatpush1.bf16.msra.mxu0 %v2277
      %2354 = vmatprep.subr.bf16.mxu0 0
      %2355 = vmatpush1.bf16.msra.mxu0 %v2278
      %2356 = vmatprep.subr.bf16.mxu0 0
      %2357 = vmatpush1.bf16.msra.mxu0 %v2279
      %2358 = vmatprep.subr.bf16.mxu0 0
      %2359 = vmatpush1.bf16.msra.mxu0 %v2280
      %2360 = vmatprep.subr.bf16.mxu0 0
      %2361 = vmatpush1.bf16.msra.mxu0 %v2281
      %2362 = vmatprep.mubr.bf16.mxu0 %v1206
      %2363 = vmatmul.mubr.bf16.gmra.mrb[0].mxu0 %v1205
      %v2364 = vpop.f32.mrb[0].mxu0
      %v2365 = vadd.f32 %v664, %v2364
      %v2366 = vpop.f32.mrb[0].mxu0
      %v2367 = vpop.f32.mrb[0].mxu0
      %v2368 = vadd.f32 %v669, %v2367
      %v2369 = vpop.f32.mrb[0].mxu0
      %2370 = vmatprep.mubr.bf16.mxu0 %v1214
      %2371 = vmatmul.mubr.bf16.gmra.mrb[0].mxu0 %v1213
      %v2372 = vpop.f32.mrb[0].mxu0
      %v2373 = vadd.f32 %v674, %v2372
      %v2374 = vpop.f32.mrb[0].mxu0
      %v2375 = vpop.f32.mrb[0].mxu0
      %v2376 = vadd.f32 %v679, %v2375
      %v2377 = vpop.f32.mrb[0].mxu0
      %2378 = vmatprep.mubr.bf16.mxu0 %v1222
      %2379 = vmatmul.mubr.bf16.gmra.mrb[0].mxu0 %v1221
      %v2380 = vpop.f32.mrb[0].mxu0
      %v2381 = vadd.f32 %v684, %v2380
      %v2382 = vpop.f32.mrb[0].mxu0
      %v2383 = vpop.f32.mrb[0].mxu0
      %v2384 = vadd.f32 %v689, %v2383
      %v2385 = vpop.f32.mrb[0].mxu0
      %2386 = vmatprep.mubr.bf16.mxu0 %v1230
      %2387 = vmatmul.mubr.bf16.gmra.mrb[0].mxu0 %v1229
      %v2388 = vpop.f32.mrb[0].mxu0
      %v2389 = vadd.f32 %v694, %v2388
      %v2390 = vpop.f32.mrb[0].mxu0
      %v2391 = vpop.f32.mrb[0].mxu0
      %v2392 = vadd.f32 %v699, %v2391
      %v2393 = vpop.f32.mrb[0].mxu0
      %2394 = vmatprep.mubr.bf16.mxu0 %v1238
      %2395 = vmatmul.mubr.bf16.gmra.mrb[0].mxu0 %v1237
      %v2396 = vpop.f32.mrb[0].mxu0
      %v2397 = vadd.f32 %v704, %v2396
      %v2398 = vpop.f32.mrb[0].mxu0
      %v2399 = vpop.f32.mrb[0].mxu0
      %v2400 = vadd.f32 %v709, %v2399
      %v2401 = vpop.f32.mrb[0].mxu0
      %2402 = vmatprep.mubr.bf16.mxu0 %v1246
      %2403 = vmatmul.mubr.bf16.gmra.mrb[0].mxu0 %v1245
      %v2404 = vpop.f32.mrb[0].mxu0
      %v2405 = vadd.f32 %v714, %v2404
      %v2406 = vpop.f32.mrb[0].mxu0
      %v2407 = vpop.f32.mrb[0].mxu0
      %v2408 = vadd.f32 %v719, %v2407
      %v2409 = vpop.f32.mrb[0].mxu0
      %2410 = vmatprep.mubr.bf16.mxu0 %v1254
      %2411 = vmatmul.mubr.bf16.gmra.mrb[0].mxu0 %v1253
      %v2412 = vpop.f32.mrb[0].mxu0
      %v2413 = vadd.f32 %v724, %v2412
      %v2414 = vpop.f32.mrb[0].mxu0
      %v2415 = vpop.f32.mrb[0].mxu0
      %v2416 = vadd.f32 %v729, %v2415
      %v2417 = vpop.f32.mrb[0].mxu0
      %2418 = vmatprep.mubr.bf16.mxu0 %v1262
      %2419 = vmatmul.mubr.bf16.gmra.mrb[0].mxu0 %v1261
      %v2420 = vpop.f32.mrb[0].mxu0
      %v2421 = vadd.f32 %v734, %v2420
      %v2422 = vpop.f32.mrb[0].mxu0
      %v2423 = vpop.f32.mrb[0].mxu0
      %v2424 = vadd.f32 %v739, %v2423
      %v2425 = vpop.f32.mrb[0].mxu0
      %2426 = vmatprep.mubr.bf16.mxu0 %v1270
      %2427 = vmatmul.mubr.bf16.gmra.mrb[0].mxu0 %v1269
      %v2428 = vpop.f32.mrb[0].mxu0
      %v2429 = vadd.f32 %v744, %v2428
      %v2430 = vpop.f32.mrb[0].mxu0
      %v2431 = vpop.f32.mrb[0].mxu0
      %v2432 = vadd.f32 %v749, %v2431
      %v2433 = vpop.f32.mrb[0].mxu0
      %2434 = vmatprep.mubr.bf16.mxu0 %v1278
      %2435 = vmatmul.mubr.bf16.gmra.mrb[0].mxu0 %v1277
      %v2436 = vpop.f32.mrb[0].mxu0
      %v2437 = vadd.f32 %v754, %v2436
      %v2438 = vpop.f32.mrb[0].mxu0
      %v2439 = vpop.f32.mrb[0].mxu0
      %v2440 = vadd.f32 %v759, %v2439
      %v2441 = vpop.f32.mrb[0].mxu0
      %2442 = vmatprep.mubr.bf16.mxu0 %v1286
      %2443 = vmatmul.mubr.bf16.gmra.mrb[0].mxu0 %v1285
      %v2444 = vpop.f32.mrb[0].mxu0
      %v2445 = vadd.f32 %v764, %v2444
      %v2446 = vpop.f32.mrb[0].mxu0
      %v2447 = vpop.f32.mrb[0].mxu0
      %v2448 = vadd.f32 %v769, %v2447
      %v2449 = vpop.f32.mrb[0].mxu0
      %2450 = vmatprep.mubr.bf16.mxu0 %v1294
      %2451 = vmatmul.mubr.bf16.gmra.mrb[0].mxu0 %v1293
      %v2452 = vpop.f32.mrb[0].mxu0
      %v2453 = vadd.f32 %v774, %v2452
      %v2454 = vpop.f32.mrb[0].mxu0
      %v2455 = vpop.f32.mrb[0].mxu0
      %v2456 = vadd.f32 %v779, %v2455
      %v2457 = vpop.f32.mrb[0].mxu0
      %2458 = vmatprep.mubr.bf16.mxu0 %v1302
      %2459 = vmatmul.mubr.bf16.gmra.mrb[0].mxu0 %v1301
      %v2460 = vpop.f32.mrb[0].mxu0
      %v2461 = vadd.f32 %v784, %v2460
      %v2462 = vpop.f32.mrb[0].mxu0
      %v2463 = vpop.f32.mrb[0].mxu0
      %v2464 = vadd.f32 %v789, %v2463
      %v2465 = vpop.f32.mrb[0].mxu0
      %2466 = vmatprep.mubr.bf16.mxu0 %v1310
      %2467 = vmatmul.mubr.bf16.gmra.mrb[0].mxu0 %v1309
      %v2468 = vpop.f32.mrb[0].mxu0
      %v2469 = vadd.f32 %v794, %v2468
      %v2470 = vpop.f32.mrb[0].mxu0
      %v2471 = vpop.f32.mrb[0].mxu0
      %v2472 = vadd.f32 %v799, %v2471
      %v2473 = vpop.f32.mrb[0].mxu0
      %2474 = vmatprep.mubr.bf16.mxu0 %v1318
      %2475 = vmatmul.mubr.bf16.gmra.mrb[0].mxu0 %v1317
      %v2476 = vpop.f32.mrb[0].mxu0
      %v2477 = vadd.f32 %v804, %v2476
      %v2478 = vpop.f32.mrb[0].mxu0
      %v2479 = vpop.f32.mrb[0].mxu0
      %v2480 = vadd.f32 %v809, %v2479
      %v2481 = vpop.f32.mrb[0].mxu0
      %2482 = vmatprep.mubr.bf16.mxu0 %v1326
      %2483 = vmatmul.mubr.bf16.gmra.mrb[0].mxu0 %v1325
      %v2484 = vpop.f32.mrb[0].mxu0
      %v2485 = vadd.f32 %v814, %v2484
      %v2486 = vpop.f32.mrb[0].mxu0
      %v2487 = vpop.f32.mrb[0].mxu0
      %v2488 = vadd.f32 %v819, %v2487
      %v2489 = vpop.f32.mrb[0].mxu0
      %2490 = vdwg.mxu0
      %2491 = vmatprep.subr.bf16.mxu0 0
      %2492 = vmatpush1.bf16.msra.mxu0 %v2282
      %2493 = vmatprep.subr.bf16.mxu0 0
      %2494 = vmatpush1.bf16.msra.mxu0 %v2283
      %2495 = vmatprep.subr.bf16.mxu0 0
      %2496 = vmatpush1.bf16.msra.mxu0 %v2284
      %2497 = vmatprep.subr.bf16.mxu0 0
      %2498 = vmatpush1.bf16.msra.mxu0 %v2285
      %2499 = vmatprep.subr.bf16.mxu0 0
      %2500 = vmatpush1.bf16.msra.mxu0 %v2286
      %2501 = vmatprep.subr.bf16.mxu0 0
      %2502 = vmatpush1.bf16.msra.mxu0 %v2287
      %2503 = vmatprep.subr.bf16.mxu0 0
      %2504 = vmatpush1.bf16.msra.mxu0 %v2288
      %2505 = vmatprep.subr.bf16.mxu0 0
      %2506 = vmatpush1.bf16.msra.mxu0 %v2289
      %2507 = vmatprep.subr.bf16.mxu0 0
      %2508 = vmatpush1.bf16.msra.mxu0 %v2290
      %2509 = vmatprep.subr.bf16.mxu0 0
      %2510 = vmatpush1.bf16.msra.mxu0 %v2291
      %2511 = vmatprep.subr.bf16.mxu0 0
      %2512 = vmatpush1.bf16.msra.mxu0 %v2292
      %2513 = vmatprep.subr.bf16.mxu0 0
      %2514 = vmatpush1.bf16.msra.mxu0 %v2293
      %2515 = vmatprep.subr.bf16.mxu0 0
      %2516 = vmatpush1.bf16.msra.mxu0 %v2294
      %2517 = vmatprep.subr.bf16.mxu0 0
      %2518 = vmatpush1.bf16.msra.mxu0 %v2295
      %2519 = vmatprep.subr.bf16.mxu0 0
      %2520 = vmatpush1.bf16.msra.mxu0 %v2296
      %2521 = vmatprep.subr.bf16.mxu0 0
      %2522 = vmatpush1.bf16.msra.mxu0 %v2297
      %2523 = vmatprep.mubr.bf16.mxu0 %v1208
      %2524 = vmatmul.mubr.bf16.gmra.mrb[0].mxu0 %v1207
      %v2525 = vpop.f32.mrb[0].mxu0
      %v2526 = vadd.f32 %v2365, %v2525
      %v2527 = vpop.f32.mrb[0].mxu0
      %v2528 = vpop.f32.mrb[0].mxu0
      %v2529 = vadd.f32 %v2368, %v2528
      %v2530 = vpop.f32.mrb[0].mxu0
      %2531 = vmatprep.mubr.bf16.mxu0 %v1216
      %2532 = vmatmul.mubr.bf16.gmra.mrb[0].mxu0 %v1215
      %v2533 = vpop.f32.mrb[0].mxu0
      %v2534 = vadd.f32 %v2373, %v2533
      %v2535 = vpop.f32.mrb[0].mxu0
      %v2536 = vpop.f32.mrb[0].mxu0
      %v2537 = vadd.f32 %v2376, %v2536
      %v2538 = vpop.f32.mrb[0].mxu0
      %2539 = vmatprep.mubr.bf16.mxu0 %v1224
      %2540 = vmatmul.mubr.bf16.gmra.mrb[0].mxu0 %v1223
      %v2541 = vpop.f32.mrb[0].mxu0
      %v2542 = vadd.f32 %v2381, %v2541
      %v2543 = vpop.f32.mrb[0].mxu0
      %v2544 = vpop.f32.mrb[0].mxu0
      %v2545 = vadd.f32 %v2384, %v2544
      %v2546 = vpop.f32.mrb[0].mxu0
      %2547 = vmatprep.mubr.bf16.mxu0 %v1232
      %2548 = vmatmul.mubr.bf16.gmra.mrb[0].mxu0 %v1231
      %v2549 = vpop.f32.mrb[0].mxu0
      %v2550 = vadd.f32 %v2389, %v2549
      %v2551 = vpop.f32.mrb[0].mxu0
      %v2552 = vpop.f32.mrb[0].mxu0
      %v2553 = vadd.f32 %v2392, %v2552
      %v2554 = vpop.f32.mrb[0].mxu0
      %2555 = vmatprep.mubr.bf16.mxu0 %v1240
      %2556 = vmatmul.mubr.bf16.gmra.mrb[0].mxu0 %v1239
      %v2557 = vpop.f32.mrb[0].mxu0
      %v2558 = vadd.f32 %v2397, %v2557
      %v2559 = vpop.f32.mrb[0].mxu0
      %v2560 = vpop.f32.mrb[0].mxu0
      %v2561 = vadd.f32 %v2400, %v2560
      %v2562 = vpop.f32.mrb[0].mxu0
      %2563 = vmatprep.mubr.bf16.mxu0 %v1248
      %2564 = vmatmul.mubr.bf16.gmra.mrb[0].mxu0 %v1247
      %v2565 = vpop.f32.mrb[0].mxu0
      %v2566 = vadd.f32 %v2405, %v2565
      %v2567 = vpop.f32.mrb[0].mxu0
      %v2568 = vpop.f32.mrb[0].mxu0
      %v2569 = vadd.f32 %v2408, %v2568
      %v2570 = vpop.f32.mrb[0].mxu0
      %2571 = vmatprep.mubr.bf16.mxu0 %v1256
      %2572 = vmatmul.mubr.bf16.gmra.mrb[0].mxu0 %v1255
      %v2573 = vpop.f32.mrb[0].mxu0
      %v2574 = vadd.f32 %v2413, %v2573
      %v2575 = vpop.f32.mrb[0].mxu0
      %v2576 = vpop.f32.mrb[0].mxu0
      %v2577 = vadd.f32 %v2416, %v2576
      %v2578 = vpop.f32.mrb[0].mxu0
      %2579 = vmatprep.mubr.bf16.mxu0 %v1264
      %2580 = vmatmul.mubr.bf16.gmra.mrb[0].mxu0 %v1263
      %v2581 = vpop.f32.mrb[0].mxu0
      %v2582 = vadd.f32 %v2421, %v2581
      %v2583 = vpop.f32.mrb[0].mxu0
      %v2584 = vpop.f32.mrb[0].mxu0
      %v2585 = vadd.f32 %v2424, %v2584
      %v2586 = vpop.f32.mrb[0].mxu0
      %2587 = vmatprep.mubr.bf16.mxu0 %v1272
      %2588 = vmatmul.mubr.bf16.gmra.mrb[0].mxu0 %v1271
      %v2589 = vpop.f32.mrb[0].mxu0
      %v2590 = vadd.f32 %v2429, %v2589
      %v2591 = vpop.f32.mrb[0].mxu0
      %v2592 = vpop.f32.mrb[0].mxu0
      %v2593 = vadd.f32 %v2432, %v2592
      %v2594 = vpop.f32.mrb[0].mxu0
      %2595 = vmatprep.mubr.bf16.mxu0 %v1280
      %2596 = vmatmul.mubr.bf16.gmra.mrb[0].mxu0 %v1279
      %v2597 = vpop.f32.mrb[0].mxu0
      %v2598 = vadd.f32 %v2437, %v2597
      %v2599 = vpop.f32.mrb[0].mxu0
      %v2600 = vpop.f32.mrb[0].mxu0
      %v2601 = vadd.f32 %v2440, %v2600
      %v2602 = vpop.f32.mrb[0].mxu0
      %2603 = vmatprep.mubr.bf16.mxu0 %v1288
      %2604 = vmatmul.mubr.bf16.gmra.mrb[0].mxu0 %v1287
      %v2605 = vpop.f32.mrb[0].mxu0
      %v2606 = vadd.f32 %v2445, %v2605
      %v2607 = vpop.f32.mrb[0].mxu0
      %v2608 = vpop.f32.mrb[0].mxu0
      %v2609 = vadd.f32 %v2448, %v2608
      %v2610 = vpop.f32.mrb[0].mxu0
      %2611 = vmatprep.mubr.bf16.mxu0 %v1296
      %2612 = vmatmul.mubr.bf16.gmra.mrb[0].mxu0 %v1295
      %v2613 = vpop.f32.mrb[0].mxu0
      %v2614 = vadd.f32 %v2453, %v2613
      %v2615 = vpop.f32.mrb[0].mxu0
      %v2616 = vpop.f32.mrb[0].mxu0
      %v2617 = vadd.f32 %v2456, %v2616
      %v2618 = vpop.f32.mrb[0].mxu0
      %2619 = vmatprep.mubr.bf16.mxu0 %v1304
      %2620 = vmatmul.mubr.bf16.gmra.mrb[0].mxu0 %v1303
      %v2621 = vpop.f32.mrb[0].mxu0
      %v2622 = vadd.f32 %v2461, %v2621
      %v2623 = vpop.f32.mrb[0].mxu0
      %v2624 = vpop.f32.mrb[0].mxu0
      %v2625 = vadd.f32 %v2464, %v2624
      %v2626 = vpop.f32.mrb[0].mxu0
      %2627 = vmatprep.mubr.bf16.mxu0 %v1312
      %2628 = vmatmul.mubr.bf16.gmra.mrb[0].mxu0 %v1311
      %v2629 = vpop.f32.mrb[0].mxu0
      %v2630 = vadd.f32 %v2469, %v2629
      %v2631 = vpop.f32.mrb[0].mxu0
      %v2632 = vpop.f32.mrb[0].mxu0
      %v2633 = vadd.f32 %v2472, %v2632
      %v2634 = vpop.f32.mrb[0].mxu0
      %2635 = vmatprep.mubr.bf16.mxu0 %v1320
      %2636 = vmatmul.mubr.bf16.gmra.mrb[0].mxu0 %v1319
      %v2637 = vpop.f32.mrb[0].mxu0
      %v2638 = vadd.f32 %v2477, %v2637
      %v2639 = vpop.f32.mrb[0].mxu0
      %v2640 = vpop.f32.mrb[0].mxu0
      %v2641 = vadd.f32 %v2480, %v2640
      %v2642 = vpop.f32.mrb[0].mxu0
      %2643 = vmatprep.mubr.bf16.mxu0 %v1328
      %2644 = vmatmul.mubr.bf16.gmra.mrb[0].mxu0 %v1327
      %v2645 = vpop.f32.mrb[0].mxu0
      %v2646 = vadd.f32 %v2485, %v2645
      %v2647 = vpop.f32.mrb[0].mxu0
      %v2648 = vpop.f32.mrb[0].mxu0
      %v2649 = vadd.f32 %v2488, %v2648
      %v2650 = vpop.f32.mrb[0].mxu0
      %2651 = vdwg.mxu0
      %2652 = vmatprep.subr.bf16.mxu0 0
      %2653 = vmatpush1.bf16.msra.mxu0 %v2298
      %2654 = vmatprep.subr.bf16.mxu0 0
      %2655 = vmatpush1.bf16.msra.mxu0 %v2299
      %2656 = vmatprep.subr.bf16.mxu0 0
      %2657 = vmatpush1.bf16.msra.mxu0 %v2300
      %2658 = vmatprep.subr.bf16.mxu0 0
      %2659 = vmatpush1.bf16.msra.mxu0 %v2301
      %2660 = vmatprep.subr.bf16.mxu0 0
      %2661 = vmatpush1.bf16.msra.mxu0 %v2302
      %2662 = vmatprep.subr.bf16.mxu0 0
      %2663 = vmatpush1.bf16.msra.mxu0 %v2303
      %2664 = vmatprep.subr.bf16.mxu0 0
      %2665 = vmatpush1.bf16.msra.mxu0 %v2304
      %2666 = vmatprep.subr.bf16.mxu0 0
      %2667 = vmatpush1.bf16.msra.mxu0 %v2305
      %2668 = vmatprep.subr.bf16.mxu0 0
      %2669 = vmatpush1.bf16.msra.mxu0 %v2306
      %2670 = vmatprep.subr.bf16.mxu0 0
      %2671 = vmatpush1.bf16.msra.mxu0 %v2307
      %2672 = vmatprep.subr.bf16.mxu0 0
      %2673 = vmatpush1.bf16.msra.mxu0 %v2308
      %2674 = vmatprep.subr.bf16.mxu0 0
      %2675 = vmatpush1.bf16.msra.mxu0 %v2309
      %2676 = vmatprep.subr.bf16.mxu0 0
      %2677 = vmatpush1.bf16.msra.mxu0 %v2310
      %2678 = vmatprep.subr.bf16.mxu0 0
      %2679 = vmatpush1.bf16.msra.mxu0 %v2311
      %2680 = vmatprep.subr.bf16.mxu0 0
      %2681 = vmatpush1.bf16.msra.mxu0 %v2312
      %2682 = vmatprep.subr.bf16.mxu0 0
      %2683 = vmatpush1.bf16.msra.mxu0 %v2313
      %2684 = vmatprep.mubr.bf16.mxu0 %v1210
      %2685 = vmatmul.mubr.bf16.gmra.mrb[0].mxu0 %v1209
      %v2686 = vpop.f32.mrb[0].mxu0
      %v2687 = vadd.f32 %v2526, %v2686
      %v2688 = vpop.f32.mrb[0].mxu0
      %v2689 = vpop.f32.mrb[0].mxu0
      %v2690 = vadd.f32 %v2529, %v2689
      %v2691 = vpop.f32.mrb[0].mxu0
      %2692 = vmatprep.mubr.bf16.mxu0 %v1218
      %2693 = vmatmul.mubr.bf16.gmra.mrb[0].mxu0 %v1217
      %v2694 = vpop.f32.mrb[0].mxu0
      %v2695 = vadd.f32 %v2534, %v2694
      %v2696 = vpop.f32.mrb[0].mxu0
      %v2697 = vpop.f32.mrb[0].mxu0
      %v2698 = vadd.f32 %v2537, %v2697
      %v2699 = vpop.f32.mrb[0].mxu0
      %2700 = vmatprep.mubr.bf16.mxu0 %v1226
      %2701 = vmatmul.mubr.bf16.gmra.mrb[0].mxu0 %v1225
      %v2702 = vpop.f32.mrb[0].mxu0
      %v2703 = vadd.f32 %v2542, %v2702
      %v2704 = vpop.f32.mrb[0].mxu0
      %v2705 = vpop.f32.mrb[0].mxu0
      %v2706 = vadd.f32 %v2545, %v2705
      %v2707 = vpop.f32.mrb[0].mxu0
      %2708 = vmatprep.mubr.bf16.mxu0 %v1234
      %2709 = vmatmul.mubr.bf16.gmra.mrb[0].mxu0 %v1233
      %v2710 = vpop.f32.mrb[0].mxu0
      %v2711 = vadd.f32 %v2550, %v2710
      %v2712 = vpop.f32.mrb[0].mxu0
      %v2713 = vpop.f32.mrb[0].mxu0
      %v2714 = vadd.f32 %v2553, %v2713
      %v2715 = vpop.f32.mrb[0].mxu0
      %2716 = vmatprep.mubr.bf16.mxu0 %v1242
      %2717 = vmatmul.mubr.bf16.gmra.mrb[0].mxu0 %v1241
      %v2718 = vpop.f32.mrb[0].mxu0
      %v2719 = vadd.f32 %v2558, %v2718
      %v2720 = vpop.f32.mrb[0].mxu0
      %v2721 = vpop.f32.mrb[0].mxu0
      %v2722 = vadd.f32 %v2561, %v2721
      %v2723 = vpop.f32.mrb[0].mxu0
      %2724 = vmatprep.mubr.bf16.mxu0 %v1250
      %2725 = vmatmul.mubr.bf16.gmra.mrb[0].mxu0 %v1249
      %v2726 = vpop.f32.mrb[0].mxu0
      %v2727 = vadd.f32 %v2566, %v2726
      %v2728 = vpop.f32.mrb[0].mxu0
      %v2729 = vpop.f32.mrb[0].mxu0
      %v2730 = vadd.f32 %v2569, %v2729
      %v2731 = vpop.f32.mrb[0].mxu0
      %2732 = vmatprep.mubr.bf16.mxu0 %v1258
      %2733 = vmatmul.mubr.bf16.gmra.mrb[0].mxu0 %v1257
      %v2734 = vpop.f32.mrb[0].mxu0
      %v2735 = vadd.f32 %v2574, %v2734
      %v2736 = vpop.f32.mrb[0].mxu0
      %v2737 = vpop.f32.mrb[0].mxu0
      %v2738 = vadd.f32 %v2577, %v2737
      %v2739 = vpop.f32.mrb[0].mxu0
      %2740 = vmatprep.mubr.bf16.mxu0 %v1266
      %2741 = vmatmul.mubr.bf16.gmra.mrb[0].mxu0 %v1265
      %v2742 = vpop.f32.mrb[0].mxu0
      %v2743 = vadd.f32 %v2582, %v2742
      %v2744 = vpop.f32.mrb[0].mxu0
      %v2745 = vpop.f32.mrb[0].mxu0
      %v2746 = vadd.f32 %v2585, %v2745
      %v2747 = vpop.f32.mrb[0].mxu0
      %2748 = vmatprep.mubr.bf16.mxu0 %v1274
      %2749 = vmatmul.mubr.bf16.gmra.mrb[0].mxu0 %v1273
      %v2750 = vpop.f32.mrb[0].mxu0
      %v2751 = vadd.f32 %v2590, %v2750
      %v2752 = vpop.f32.mrb[0].mxu0
      %v2753 = vpop.f32.mrb[0].mxu0
      %v2754 = vadd.f32 %v2593, %v2753
      %v2755 = vpop.f32.mrb[0].mxu0
      %2756 = vmatprep.mubr.bf16.mxu0 %v1282
      %2757 = vmatmul.mubr.bf16.gmra.mrb[0].mxu0 %v1281
      %v2758 = vpop.f32.mrb[0].mxu0
      %v2759 = vadd.f32 %v2598, %v2758
      %v2760 = vpop.f32.mrb[0].mxu0
      %v2761 = vpop.f32.mrb[0].mxu0
      %v2762 = vadd.f32 %v2601, %v2761
      %v2763 = vpop.f32.mrb[0].mxu0
      %2764 = vmatprep.mubr.bf16.mxu0 %v1290
      %2765 = vmatmul.mubr.bf16.gmra.mrb[0].mxu0 %v1289
      %v2766 = vpop.f32.mrb[0].mxu0
      %v2767 = vadd.f32 %v2606, %v2766
      %v2768 = vpop.f32.mrb[0].mxu0
      %v2769 = vpop.f32.mrb[0].mxu0
      %v2770 = vadd.f32 %v2609, %v2769
      %v2771 = vpop.f32.mrb[0].mxu0
      %2772 = vmatprep.mubr.bf16.mxu0 %v1298
      %2773 = vmatmul.mubr.bf16.gmra.mrb[0].mxu0 %v1297
      %v2774 = vpop.f32.mrb[0].mxu0
      %v2775 = vadd.f32 %v2614, %v2774
      %v2776 = vpop.f32.mrb[0].mxu0
      %v2777 = vpop.f32.mrb[0].mxu0
      %v2778 = vadd.f32 %v2617, %v2777
      %v2779 = vpop.f32.mrb[0].mxu0
      %2780 = vmatprep.mubr.bf16.mxu0 %v1306
      %2781 = vmatmul.mubr.bf16.gmra.mrb[0].mxu0 %v1305
      %v2782 = vpop.f32.mrb[0].mxu0
      %v2783 = vadd.f32 %v2622, %v2782
      %v2784 = vpop.f32.mrb[0].mxu0
      %v2785 = vpop.f32.mrb[0].mxu0
      %v2786 = vadd.f32 %v2625, %v2785
      %v2787 = vpop.f32.mrb[0].mxu0
      %2788 = vmatprep.mubr.bf16.mxu0 %v1314
      %2789 = vmatmul.mubr.bf16.gmra.mrb[0].mxu0 %v1313
      %v2790 = vpop.f32.mrb[0].mxu0
      %v2791 = vadd.f32 %v2630, %v2790
      %v2792 = vpop.f32.mrb[0].mxu0
      %v2793 = vpop.f32.mrb[0].mxu0
      %v2794 = vadd.f32 %v2633, %v2793
      %v2795 = vpop.f32.mrb[0].mxu0
      %2796 = vmatprep.mubr.bf16.mxu0 %v1322
      %2797 = vmatmul.mubr.bf16.gmra.mrb[0].mxu0 %v1321
      %v2798 = vpop.f32.mrb[0].mxu0
      %v2799 = vadd.f32 %v2638, %v2798
      %v2800 = vpop.f32.mrb[0].mxu0
      %v2801 = vpop.f32.mrb[0].mxu0
      %v2802 = vadd.f32 %v2641, %v2801
      %v2803 = vpop.f32.mrb[0].mxu0
      %2804 = vmatprep.mubr.bf16.mxu0 %v1330
      %2805 = vmatmul.mubr.bf16.gmra.mrb[0].mxu0 %v1329
      %v2806 = vpop.f32.mrb[0].mxu0
      %v2807 = vadd.f32 %v2646, %v2806
      %v2808 = vpop.f32.mrb[0].mxu0
      %v2809 = vpop.f32.mrb[0].mxu0
      %v2810 = vadd.f32 %v2649, %v2809
      %v2811 = vpop.f32.mrb[0].mxu0
      %2812 = vdwg.mxu0
      %2813 = vmatprep.subr.bf16.mxu0 0
      %2814 = vmatpush1.bf16.msra.mxu0 %v2314
      %2815 = vmatprep.subr.bf16.mxu0 0
      %2816 = vmatpush1.bf16.msra.mxu0 %v2315
      %2817 = vmatprep.subr.bf16.mxu0 0
      %2818 = vmatpush1.bf16.msra.mxu0 %v2316
      %2819 = vmatprep.subr.bf16.mxu0 0
      %2820 = vmatpush1.bf16.msra.mxu0 %v2317
      %2821 = vmatprep.subr.bf16.mxu0 0
      %2822 = vmatpush1.bf16.msra.mxu0 %v2318
      %2823 = vmatprep.subr.bf16.mxu0 0
      %2824 = vmatpush1.bf16.msra.mxu0 %v2319
      %2825 = vmatprep.subr.bf16.mxu0 0
      %2826 = vmatpush1.bf16.msra.mxu0 %v2320
      %2827 = vmatprep.subr.bf16.mxu0 0
      %2828 = vmatpush1.bf16.msra.mxu0 %v2321
      %2829 = vmatprep.subr.bf16.mxu0 0
      %2830 = vmatpush1.bf16.msra.mxu0 %v2322
      %2831 = vmatprep.subr.bf16.mxu0 0
      %2832 = vmatpush1.bf16.msra.mxu0 %v2323
      %2833 = vmatprep.subr.bf16.mxu0 0
      %2834 = vmatpush1.bf16.msra.mxu0 %v2324
      %2835 = vmatprep.subr.bf16.mxu0 0
      %2836 = vmatpush1.bf16.msra.mxu0 %v2325
      %2837 = vmatprep.subr.bf16.mxu0 0
      %2838 = vmatpush1.bf16.msra.mxu0 %v2326
      %2839 = vmatprep.subr.bf16.mxu0 0
      %2840 = vmatpush1.bf16.msra.mxu0 %v2327
      %2841 = vmatprep.subr.bf16.mxu0 0
      %2842 = vmatpush1.bf16.msra.mxu0 %v2328
      %2843 = vmatprep.subr.bf16.mxu0 0
      %2844 = vmatpush1.bf16.msra.mxu0 %v2329
      %2845 = vmatprep.mubr.bf16.mxu0 %v1212
      %2846 = vmatmul.mubr.bf16.gmra.mrb[0].mxu0 %v1211
      %v2847 = vpop.f32.mrb[0].mxu0
      %v2848 = vadd.f32 %v2687, %v2847
      %v2849 = vpop.f32.mrb[0].mxu0
      %v2850 = vpop.f32.mrb[0].mxu0
      %v2851 = vadd.f32 %v2690, %v2850
      %v2852 = vpop.f32.mrb[0].mxu0
      %2853 = vmatprep.mubr.bf16.mxu0 %v1220
      %2854 = vmatmul.mubr.bf16.gmra.mrb[0].mxu0 %v1219
      %v2855 = vpop.f32.mrb[0].mxu0
      %v2856 = vadd.f32 %v2695, %v2855
      %v2857 = vpop.f32.mrb[0].mxu0
      %v2858 = vpop.f32.mrb[0].mxu0
      %v2859 = vadd.f32 %v2698, %v2858
      %v2860 = vpop.f32.mrb[0].mxu0
      %2861 = vmatprep.mubr.bf16.mxu0 %v1228
      %2862 = vmatmul.mubr.bf16.gmra.mrb[0].mxu0 %v1227
      %v2863 = vpop.f32.mrb[0].mxu0
      %v2864 = vadd.f32 %v2703, %v2863
      %v2865 = vpop.f32.mrb[0].mxu0
      %v2866 = vpop.f32.mrb[0].mxu0
      %v2867 = vadd.f32 %v2706, %v2866
      %v2868 = vpop.f32.mrb[0].mxu0
      %2869 = vmatprep.mubr.bf16.mxu0 %v1236
      %2870 = vmatmul.mubr.bf16.gmra.mrb[0].mxu0 %v1235
      %v2871 = vpop.f32.mrb[0].mxu0
      %v2872 = vadd.f32 %v2711, %v2871
      %v2873 = vpop.f32.mrb[0].mxu0
      %v2874 = vpop.f32.mrb[0].mxu0
      %v2875 = vadd.f32 %v2714, %v2874
      %v2876 = vpop.f32.mrb[0].mxu0
      %2877 = vmatprep.mubr.bf16.mxu0 %v1244
      %2878 = vmatmul.mubr.bf16.gmra.mrb[0].mxu0 %v1243
      %v2879 = vpop.f32.mrb[0].mxu0
      %v2880 = vadd.f32 %v2719, %v2879
      %v2881 = vpop.f32.mrb[0].mxu0
      %v2882 = vpop.f32.mrb[0].mxu0
      %v2883 = vadd.f32 %v2722, %v2882
      %v2884 = vpop.f32.mrb[0].mxu0
      %2885 = vmatprep.mubr.bf16.mxu0 %v1252
      %2886 = vmatmul.mubr.bf16.gmra.mrb[0].mxu0 %v1251
      %v2887 = vpop.f32.mrb[0].mxu0
      %v2888 = vadd.f32 %v2727, %v2887
      %v2889 = vpop.f32.mrb[0].mxu0
      %v2890 = vpop.f32.mrb[0].mxu0
      %v2891 = vadd.f32 %v2730, %v2890
      %v2892 = vpop.f32.mrb[0].mxu0
      %2893 = vmatprep.mubr.bf16.mxu0 %v1260
      %2894 = vmatmul.mubr.bf16.gmra.mrb[0].mxu0 %v1259
      %v2895 = vpop.f32.mrb[0].mxu0
      %v2896 = vadd.f32 %v2735, %v2895
      %v2897 = vpop.f32.mrb[0].mxu0
      %v2898 = vpop.f32.mrb[0].mxu0
      %v2899 = vadd.f32 %v2738, %v2898
      %v2900 = vpop.f32.mrb[0].mxu0
      %2901 = vmatprep.mubr.bf16.mxu0 %v1268
      %2902 = vmatmul.mubr.bf16.gmra.mrb[0].mxu0 %v1267
      %v2903 = vpop.f32.mrb[0].mxu0
      %v2904 = vadd.f32 %v2743, %v2903
      %v2905 = vpop.f32.mrb[0].mxu0
      %v2906 = vpop.f32.mrb[0].mxu0
      %v2907 = vadd.f32 %v2746, %v2906
      %v2908 = vpop.f32.mrb[0].mxu0
      %2909 = vmatprep.mubr.bf16.mxu0 %v1276
      %2910 = vmatmul.mubr.bf16.gmra.mrb[0].mxu0 %v1275
      %v2911 = vpop.f32.mrb[0].mxu0
      %v2912 = vadd.f32 %v2751, %v2911
      %v2913 = vpop.f32.mrb[0].mxu0
      %v2914 = vpop.f32.mrb[0].mxu0
      %v2915 = vadd.f32 %v2754, %v2914
      %v2916 = vpop.f32.mrb[0].mxu0
      %2917 = vmatprep.mubr.bf16.mxu0 %v1284
      %2918 = vmatmul.mubr.bf16.gmra.mrb[0].mxu0 %v1283
      %v2919 = vpop.f32.mrb[0].mxu0
      %v2920 = vadd.f32 %v2759, %v2919
      %v2921 = vpop.f32.mrb[0].mxu0
      %v2922 = vpop.f32.mrb[0].mxu0
      %v2923 = vadd.f32 %v2762, %v2922
      %v2924 = vpop.f32.mrb[0].mxu0
      %2925 = vmatprep.mubr.bf16.mxu0 %v1292
      %2926 = vmatmul.mubr.bf16.gmra.mrb[0].mxu0 %v1291
      %v2927 = vpop.f32.mrb[0].mxu0
      %v2928 = vadd.f32 %v2767, %v2927
      %v2929 = vpop.f32.mrb[0].mxu0
      %v2930 = vpop.f32.mrb[0].mxu0
      %v2931 = vadd.f32 %v2770, %v2930
      %v2932 = vpop.f32.mrb[0].mxu0
      %2933 = vmatprep.mubr.bf16.mxu0 %v1300
      %2934 = vmatmul.mubr.bf16.gmra.mrb[0].mxu0 %v1299
      %v2935 = vpop.f32.mrb[0].mxu0
      %v2936 = vadd.f32 %v2775, %v2935
      %v2937 = vpop.f32.mrb[0].mxu0
      %v2938 = vpop.f32.mrb[0].mxu0
      %v2939 = vadd.f32 %v2778, %v2938
      %v2940 = vpop.f32.mrb[0].mxu0
      %2941 = vmatprep.mubr.bf16.mxu0 %v1308
      %2942 = vmatmul.mubr.bf16.gmra.mrb[0].mxu0 %v1307
      %v2943 = vpop.f32.mrb[0].mxu0
      %v2944 = vadd.f32 %v2783, %v2943
      %v2945 = vpop.f32.mrb[0].mxu0
      %v2946 = vpop.f32.mrb[0].mxu0
      %v2947 = vadd.f32 %v2786, %v2946
      %v2948 = vpop.f32.mrb[0].mxu0
      %2949 = vmatprep.mubr.bf16.mxu0 %v1316
      %2950 = vmatmul.mubr.bf16.gmra.mrb[0].mxu0 %v1315
      %v2951 = vpop.f32.mrb[0].mxu0
      %v2952 = vadd.f32 %v2791, %v2951
      %v2953 = vpop.f32.mrb[0].mxu0
      %v2954 = vpop.f32.mrb[0].mxu0
      %v2955 = vadd.f32 %v2794, %v2954
      %v2956 = vpop.f32.mrb[0].mxu0
      %2957 = vmatprep.mubr.bf16.mxu0 %v1324
      %2958 = vmatmul.mubr.bf16.gmra.mrb[0].mxu0 %v1323
      %v2959 = vpop.f32.mrb[0].mxu0
      %v2960 = vadd.f32 %v2799, %v2959
      %v2961 = vpop.f32.mrb[0].mxu0
      %v2962 = vpop.f32.mrb[0].mxu0
      %v2963 = vadd.f32 %v2802, %v2962
      %v2964 = vpop.f32.mrb[0].mxu0
      %2965 = vmatprep.mubr.bf16.mxu0 %v1332
      %2966 = vmatmul.mubr.bf16.gmra.mrb[0].mxu0 %v1331
      %v2967 = vpop.f32.mrb[0].mxu0
      %v2968 = vadd.f32 %v2807, %v2967
      %v2969 = vpop.f32.mrb[0].mxu0
      %v2970 = vpop.f32.mrb[0].mxu0
      %v2971 = vadd.f32 %v2810, %v2970
      %v2972 = vpop.f32.mrb[0].mxu0
      %2973 = vdwg.mxu0
      %2974 = vst.msk [vmem:[%s307] sm:$0xff] %vm2105, %v2848
      %2975 = vst.msk [vmem:[%s307 + $0x8] sm:$0xff] %vm2105, %v2851
      %2976 = vst.msk [vmem:[%s307 + $0x10] sm:$0xff] %vm2105, %v2856
      %2977 = vst.msk [vmem:[%s307 + $0x18] sm:$0xff] %vm2105, %v2859
      %2978 = vst.msk [vmem:[%s307 + $0x20] sm:$0xff] %vm2105, %v2864
      %2979 = vst.msk [vmem:[%s307 + $0x28] sm:$0xff] %vm2105, %v2867
      %2980 = vst.msk [vmem:[%s307 + $0x30] sm:$0xff] %vm2105, %v2872
      %2981 = vst.msk [vmem:[%s307 + $0x38] sm:$0xff] %vm2105, %v2875
      %2982 = vst.msk [vmem:[%s307 + $0x40] sm:$0xff] %vm2105, %v2880
      %2983 = vst.msk [vmem:[%s307 + $0x48] sm:$0xff] %vm2105, %v2883
      %2984 = vst.msk [vmem:[%s307 + $0x50] sm:$0xff] %vm2105, %v2888
      %2985 = vst.msk [vmem:[%s307 + $0x58] sm:$0xff] %vm2105, %v2891
      %2986 = vst.msk [vmem:[%s307 + $0x60] sm:$0xff] %vm2105, %v2896
      %2987 = vst.msk [vmem:[%s307 + $0x68] sm:$0xff] %vm2105, %v2899
      %2988 = vst.msk [vmem:[%s307 + $0x70] sm:$0xff] %vm2105, %v2904
      %2989 = vst.msk [vmem:[%s307 + $0x78] sm:$0xff] %vm2105, %v2907
      %2990 = vst.msk [vmem:[%s307 + $0x80] sm:$0xff] %vm2105, %v2912
      %2991 = vst.msk [vmem:[%s307 + $0x88] sm:$0xff] %vm2105, %v2915
      %2992 = vst.msk [vmem:[%s307 + $0x90] sm:$0xff] %vm2105, %v2920
      %2993 = vst.msk [vmem:[%s307 + $0x98] sm:$0xff] %vm2105, %v2923
      %2994 = vst.msk [vmem:[%s307 + $0xa0] sm:$0xff] %vm2105, %v2928
      %2995 = vst.msk [vmem:[%s307 + $0xa8] sm:$0xff] %vm2105, %v2931
      %2996 = vst.msk [vmem:[%s307 + $0xb0] sm:$0xff] %vm2105, %v2936
      %2997 = vst.msk [vmem:[%s307 + $0xb8] sm:$0xff] %vm2105, %v2939
      %2998 = vst.msk [vmem:[%s307 + $0xc0] sm:$0xff] %vm2105, %v2944
      %2999 = vst.msk [vmem:[%s307 + $0xc8] sm:$0xff] %vm2105, %v2947
      %3000 = vst.msk [vmem:[%s307 + $0xd0] sm:$0xff] %vm2105, %v2952
      %3001 = vst.msk [vmem:[%s307 + $0xd8] sm:$0xff] %vm2105, %v2955
      %3002 = vst.msk [vmem:[%s307 + $0xe0] sm:$0xff] %vm2105, %v2960
      %3003 = vst.msk [vmem:[%s307 + $0xe8] sm:$0xff] %vm2105, %v2963
      %3004 = vst.msk [vmem:[%s307 + $0xf0] sm:$0xff] %vm2105, %v2968
      %3005 = vst.msk [vmem:[%s307 + $0xf8] sm:$0xff] %vm2105, %v2971
      %p3006 = scmp.lt.s32.totalorder %s21, 1
      %s3007 = scalar_select %p3006, %s21, 1
      %p3008 = scmp.lt.s32.totalorder %s22, 0
      %s3009 = scalar_select %p3008, %s22, 0
      %s3010 = smul.addr %s3007, 32
      %s3011 = sadd.s32 %s3009, %s3010
      %s3012 = smul.addr %s3011, 8
      %s3013 = scalar_lea.vmem %s4, %s3012
      %p3014 = scmp.lt.s32.totalorder %s21, 1
      %s3015 = scalar_select %p3014, %s21, 1
      %p3016 = scmp.lt.s32.totalorder %s22, 0
      %s3017 = scalar_select %p3016, %s22, 0
      %s3018 = smul.addr %s3015, 32
      %s3019 = sadd.s32 %s3017, %s3018
      %s3020 = smul.addr %s3019, 8
      %s3021 = scalar_lea.vmem %s5, %s3020
      // Predicated region
      $region37: #{merged_model_forward.1} parent=35 // pred_check
        %p3022 = pneg %p147
      $region38: #{merged_model_forward.1} parent=35 // pred_check_branch
        %3024 = sbr.rel (%p3022) target = $region40
      $region39: #{merged_model_forward.1} parent=35 // pred_region
        _
      $region40: #{merged_model_forward.1} parent=35 // pred_fallthru
        _
      // Predicated region
      $region41: #{merged_model_forward.1} parent=35 // pred_check
        %p3025 = pneg %p175
      $region42: #{merged_model_forward.1} parent=35 // pred_check_branch
        %3027 = sbr.rel (%p3025) target = $region44
      $region43: #{merged_model_forward.1} parent=35 // pred_region
        _
      $region44: #{merged_model_forward.1} parent=35 // pred_fallthru
        _
    $region36: #{merged_model_forward.1} parent=5 // pred_fallthru
      _
    %p3028 = scmp.le.s32.totalorder 2, %s12
    // Predicated region
    $region45: #{merged_model_forward.1} parent=5 // pred_check
      %p3029 = pneg %p3028
    $region46: #{merged_model_forward.1} parent=5 // pred_check_branch
      %3031 = sbr.rel (%p3029) target = $region48
    $region47: #{merged_model_forward.1} parent=5 // pred_region
      %s3032 = ssub.s32 %s12, 2
      // Predicated region
      $region49: #{merged_model_forward.1} parent=47 // pred_check
        %p3033 = pneg %p153
      $region50: #{merged_model_forward.1} parent=47 // pred_check_branch
        %3035 = sbr.rel (%p3033) target = $region52
      $region51: #{merged_model_forward.1} parent=47 // pred_region
        %p3036 = scmp.lt.s32.totalorder %s23, 1
        %s3037 = scalar_select %p3036, %s23, 1
        %p3038 = scmp.lt.s32.totalorder %s24, 0
        %s3039 = scalar_select %p3038, %s24, 0
        %s3040 = smul.addr %s3037, 32
        %s3041 = sadd.s32 %s3039, %s3040
        %s3042 = smul.addr %s3041, 8
        %s3043 = scalar_lea.vmem %s4, %s3042
      $region52: #{merged_model_forward.1} parent=47 // pred_fallthru
        _
      // Predicated region
      $region53: #{merged_model_forward.1} parent=47 // pred_check
        %p3044 = pneg %p181
      $region54: #{merged_model_forward.1} parent=47 // pred_check_branch
        %3046 = sbr.rel (%p3044) target = $region56
      $region55: #{merged_model_forward.1} parent=47 // pred_region
        %p3047 = scmp.lt.s32.totalorder %s23, 1
        %s3048 = scalar_select %p3047, %s23, 1
        %p3049 = scmp.lt.s32.totalorder %s24, 0
        %s3050 = scalar_select %p3049, %s24, 0
        %s3051 = smul.addr %s3048, 32
        %s3052 = sadd.s32 %s3050, %s3051
        %s3053 = smul.addr %s3052, 8
        %s3054 = scalar_lea.vmem %s5, %s3053
      $region56: #{merged_model_forward.1} parent=47 // pred_fallthru
        _
    $region48: #{merged_model_forward.1} parent=5 // pred_fallthru
      _
  $region6: #{merged_model_forward.1} parent=0 // loop_footer
    %s16 = sadd.s32 1, %s12
  $region7: #{merged_model_forward.1} parent=0 // loop_footer_branch
    %11 = sbr.rel target = $region3
  $region8: #{merged_model_forward.1} parent=0 // loop_exit
    _

</llo_original>
